<compile_context>
chip_gen: v7x
topology: tpu7x:2x2x1
jax: 0.10.0
libtpu: 0.0.40
codegen_flags: <defaults>
</compile_context>

<pallas_src>
import functools

import jax
import jax.numpy as jnp
from jax.experimental import pallas as pl
from jax.experimental.pallas import tpu as pltpu

BN_EPS = 1e-5          # torch BatchNorm1d default eps
NORM_EPS = 1e-12       # F.normalize default eps
NEG_SLOPE = 0.2        # GATv2Conv default negative_slope
NEG_INF = -1e30        # softmax mask value (f32)

# bf16 operands on the MXU on every TPU generation; accumulation stays f32.
MM_DT = jnp.bfloat16


def _mm(a, b):
    """MXU matmul: bf16 operands, f32 accumulation."""
    return jnp.dot(a.astype(MM_DT), b.astype(MM_DT),
                   preferred_element_type=jnp.float32)


def _leaky(v):
    return jnp.where(v >= 0.0, v, NEG_SLOPE * v)


def _l2norm(z):
    # F.normalize(p=2, dim=-1): z / max(||z||_2, eps)
    return z * jax.lax.rsqrt(
        jnp.maximum(jnp.sum(z * z, axis=-1, keepdims=True), NORM_EPS * NORM_EPS))


# ----------------------------- fused encoder kernel ---------------------------

def _encoder_kernel(src_c_ref, dst_c_ref, dst_r_ref, bat_r_ref,
                    x_ref, eattr_ref, img_ref, txt_ref,
                    wlr1_ref, we1_ref, vec1_ref,
                    wlr2_ref, we2_ref, vec2_ref,
                    wt_ref, vect_ref,
                    emb_ref, img_o_ref, txt_o_ref):
    x = x_ref[...]                                     # [N, C] f32
    e_attr = eattr_ref[...]                            # [E, C] f32
    N, C = x.shape
    E = e_attr.shape[0]
    G = emb_ref.shape[0]

    # ---- graph structure: built once from int32 index vectors, shared by both
    #      GAT layers.  All gathers / scatters become one-hot MXU matmuls.
    src_c = src_c_ref[...]                             # [E, 1] int32
    dst_c = dst_c_ref[...]                             # [E, 1] int32
    dst_r = dst_r_ref[...]                             # [1, E] int32
    bat_r = bat_r_ref[...]                             # [1, N] int32

    en_iota = jax.lax.broadcasted_iota(jnp.int32, (E, N), 1)
    S = (src_c == en_iota).astype(jnp.float32)         # [E, N] one-hot source
    D = (dst_c == en_iota).astype(jnp.float32)         # [E, N] one-hot target
    DT = (dst_r == jax.lax.broadcasted_iota(jnp.int32, (N, E), 0)
          ).astype(jnp.float32)                        # [N, E] == D^T
    mtT = (bat_r == jax.lax.broadcasted_iota(jnp.int32, (G, N), 0)
           ).astype(jnp.float32)                       # [G, N] membership^T

    adj = _mm(DT, S)                                   # [N, N] (dst,src) edge count
    eye = (jax.lax.broadcasted_iota(jnp.int32, (N, N), 0) ==
           jax.lax.broadcasted_iota(jnp.int32, (N, N), 1)).astype(jnp.float32)
    mask = (adj + eye) > 0.0                           # adjacency incl. self loops
    deg = jnp.sum(adj, axis=-1, keepdims=True)         # [N, 1] in-degree
    inv_deg = 1.0 / jnp.maximum(deg, 1.0)

    def gat_layer(h, w_lr_ref, w_e_ref, vec_ref):
        # GATv2Conv(heads=1, edge_dim=C, add_self_loops fill='mean') + bias +
        # BatchNorm(eval, folded to scale/shift) + Dropout(id) + tanh, fused.
        vec = vec_ref[...]                             # [8, C] packed vectors
        b_l, b_r, att = vec[0:1], vec[1:2], vec[2:3]
        scale, shift = vec[3:4], vec[4:5]

        xlr = _mm(h, w_lr_ref[...])                    # lin_l | lin_r   [N, 2C]
        x_l = xlr[:, :C] + b_l
        x_r = xlr[:, C:] + b_r
        e_t = _mm(e_attr, w_e_ref[...])                # lin_edge        [E, C]
        loop_t = _mm(DT, e_t) * inv_deg                # 'mean' self-loop attr [N, C]

        # per-edge and per-self-loop attention logits
        m_edge = _leaky(_mm(S, x_l) + _mm(D, x_r) + e_t)               # [E, C]
        logit_e = jnp.sum(m_edge * att, axis=-1, keepdims=True)        # [E, 1]
        m_loop = _leaky(x_l + x_r + loop_t)                            # [N, C]
        logit_loop = jnp.sum(m_loop * att, axis=-1, keepdims=True)     # [N, 1]

        # dense [dst, src] logits via one-hot scatter + diagonal self loops
        # (valid for simple graphs: duplicate (src,dst) pairs would sum logits)
        dense = _mm(DT, logit_e * S) + eye * logit_loop                # [N, N]
        logits = jnp.where(mask, dense, NEG_INF)
        mx = jnp.max(logits, axis=-1, keepdims=True)
        p = jnp.exp(logits - mx)                       # masked entries -> 0
        alpha = p / jnp.sum(p, axis=-1, keepdims=True)
        out = _mm(alpha, x_l)                          # aggregate       [N, C]
        return jnp.tanh(out * scale + shift)           # bias+BN folded, tanh

    h = gat_layer(x, wlr1_ref, we1_ref, vec1_ref)
    h = gat_layer(h, wlr2_ref, we2_ref, vec2_ref)

    # ---- tail: AttentionalAggregation + lin + L2norm, blip image/text heads
    wt = wt_ref[...]                                   # [5C, C] packed weights
    w1, w2 = wt[0:C], wt[C:2 * C]
    w_lin, w_img, w_txt = wt[2 * C:3 * C], wt[3 * C:4 * C], wt[4 * C:5 * C]
    vt = vect_ref[...]                                 # [8, C] packed vectors
    b1, b2, b_lin = vt[0:1], vt[1:2], vt[2:3]
    sc_i, sh_i, sc_t, sh_t = vt[3:4], vt[4:5], vt[5:6], vt[6:7]

    gate = _mm(jnp.tanh(_mm(h, w1) + b1), w2) + b2     # gate_nn(h)      [N, C]
    # Per-graph, per-feature softmax over member nodes, stabilized with the
    # GLOBAL per-feature max (softmax is shift-invariant per graph); avoids the
    # O(G*N*C) masked broadcast.  NOTE: a graph whose gates sit ~88+ below the
    # global max underflows exp and collapses toward 0 (acceptable here).
    gmax = jnp.max(gate, axis=0, keepdims=True)        # [1, C]
    w = jnp.exp(gate - gmax)                           # [N, C]
    num = _mm(mtT, w * h)                              # [G, C]
    den = jnp.maximum(_mm(mtT, w), NORM_EPS)           # guard empty graphs
    pooled = num / den

    emb_ref[...] = _l2norm(_mm(pooled, w_lin) + b_lin)
    img_o_ref[...] = _l2norm(jnp.tanh(_mm(img_ref[...], w_img) * sc_i + sh_i))
    txt_o_ref[...] = _l2norm(jnp.tanh(_mm(txt_ref[...], w_txt) * sc_t + sh_t))


# ------------------------------ parameter prep ---------------------------------

def prepare_params(params):
    """Fold eval-BatchNorm (+ biases) into affine scale/shift, pack the small
    per-layer vectors into [8, C] arrays and the weight matrices into packed
    blocks; cast weight-matmul operands to bf16."""
    C = params['conv1']['w_l'].shape[0]

    def bn_affine(bias, m):
        scale = m['gamma'] * jax.lax.rsqrt(m['var'] + BN_EPS)
        shift = (bias - m['mean']) * scale + m['beta']
        return scale, shift

    def gat_pack(conv, bn):
        scale, shift = bn_affine(conv['bias'], bn)
        return dict(
            w_lr=jnp.concatenate([conv['w_l'], conv['w_r']], axis=1).astype(MM_DT),
            w_e=conv['w_e'].astype(MM_DT),
            vec=jnp.concatenate([conv['b_l'], conv['b_r'], conv['att'],
                                 scale, shift,
                                 jnp.zeros((3, C), jnp.float32)], axis=0))

    p = params
    sc_i, sh_i = bn_affine(p['img']['b'], p['img'])
    sc_t, sh_t = bn_affine(p['txt']['b'], p['txt'])
    return dict(
        gat1=gat_pack(p['conv1'], p['bn1']),
        gat2=gat_pack(p['conv2'], p['bn2']),
        w_tail=jnp.concatenate([p['agg']['w1'], p['agg']['w2'], p['lin']['w'],
                                p['img']['w'], p['txt']['w']],
                               axis=0).astype(MM_DT),
        vec_tail=jnp.concatenate([p['agg']['b1'], p['agg']['b2'], p['lin']['b'],
                                  sc_i, sh_i, sc_t, sh_t,
                                  jnp.zeros((1, C), jnp.float32)], axis=0))


# -------------------------------- forward --------------------------------------

@functools.partial(jax.jit, static_argnames=("num_graphs",))
def encoder_forward(prep, x, edge_index, edge_attr, batch,
                    blip_image_features, blip_text_features, num_graphs):
    N, C = x.shape
    E = edge_attr.shape[0]
    G = int(num_graphs)

    src_c = edge_index[0].astype(jnp.int32).reshape(E, 1)
    dst_c = edge_index[1].astype(jnp.int32).reshape(E, 1)
    dst_r = edge_index[1].astype(jnp.int32).reshape(1, E)
    bat_r = batch.astype(jnp.int32).reshape(1, N)

    vmem = pl.BlockSpec(memory_space=pltpu.MemorySpace.VMEM)
    out_sds = jax.ShapeDtypeStruct((G, C), jnp.float32)

    return pl.pallas_call(
        _encoder_kernel,
        out_shape=(out_sds, out_sds, out_sds),
        in_specs=[vmem] * 16,
        out_specs=(vmem, vmem, vmem),
    )(src_c, dst_c, dst_r, bat_r,
      x, edge_attr, blip_image_features, blip_text_features,
      prep['gat1']['w_lr'], prep['gat1']['w_e'], prep['gat1']['vec'],
      prep['gat2']['w_lr'], prep['gat2']['w_e'], prep['gat2']['vec'],
      prep['w_tail'], prep['vec_tail'])


# --------------------------- parameter creation -------------------------------

def init_params(key, C):
    ks = iter(jax.random.split(key, 64))

    def lin(cin, cout, bias=True):
        w = jax.random.normal(next(ks), (cin, cout), jnp.float32) / jnp.sqrt(cin)
        b = (0.02 * jax.random.normal(next(ks), (1, cout), jnp.float32)
             if bias else jnp.zeros((1, cout), jnp.float32))
        return w, b

    def bn(c):
        return dict(
            gamma=1.0 + 0.1 * jax.random.normal(next(ks), (1, c), jnp.float32),
            beta=0.1 * jax.random.normal(next(ks), (1, c), jnp.float32),
            mean=0.1 * jax.random.normal(next(ks), (1, c), jnp.float32),
            var=0.5 + jax.random.uniform(next(ks), (1, c), jnp.float32),
        )

    def gat(c):
        w_l, b_l = lin(c, c)
        w_r, b_r = lin(c, c)
        w_e, _ = lin(c, c, bias=False)          # lin_edge has no bias
        att = jax.random.normal(next(ks), (1, c), jnp.float32) / jnp.sqrt(c)
        bias = 0.02 * jax.random.normal(next(ks), (1, c), jnp.float32)
        return dict(w_l=w_l, b_l=b_l, w_r=w_r, b_r=b_r, w_e=w_e, att=att, bias=bias)

    w1, b1 = lin(C, C)
    w2, b2 = lin(C, C)
    wl, bl = lin(C, C)
    wi, bi = lin(C, C)
    wt, bt = lin(C, C)
    return dict(
        conv1=gat(C), bn1=bn(C),
        conv2=gat(C), bn2=bn(C),
        agg=dict(w1=w1, b1=b1, w2=w2, b2=b2),
        lin=dict(w=wl, b=bl),
        img=dict(w=wi, b=bi, **bn(C)),
        txt=dict(w=wt, b=bt, **bn(C)),
    )


# --------------------------------- driver --------------------------------------

if __name__ == "__main__":
    C = 32            # hidden_channels
    G = 2             # graphs in the batch
    NPG = 8           # nodes per graph
    N = G * NPG

    key = jax.random.PRNGKey(0)
    k_x, k_e, k_img, k_txt, k_p = jax.random.split(key, 5)

    # two disjoint ring-ish graphs; no self loops, no duplicate edges
    # (GATv2Conv adds its own self loops).
    edges = []
    for g in range(G):
        base = g * NPG
        for i in range(NPG):
            edges.append((base + i, base + (i + 1) % NPG))
            edges.append((base + i, base + (i + 2) % NPG))
    edge_index = jnp.asarray(edges, dtype=jnp.int32).T      # [2, E]
    E = edge_index.shape[1]

    x = jax.random.normal(k_x, (N, C), jnp.float32)
    edge_attr = jax.random.normal(k_e, (E, C), jnp.float32)
    batch = jnp.repeat(jnp.arange(G, dtype=jnp.int32), NPG)  # [N]
    blip_image_features = jax.random.normal(k_img, (G, C), jnp.float32)
    blip_text_features = jax.random.normal(k_txt, (G, C), jnp.float32)

    params = init_params(k_p, C)
    prep = prepare_params(params)

    out = encoder_forward(prep, x, edge_index, edge_attr, batch,
                          blip_image_features, blip_text_features,
                          num_graphs=G)
    out = jax.block_until_ready(out)
    assert out[0].shape == (G, C)
    assert out[1].shape == (G, C)
    assert out[2].shape == (G, C)
    assert all(bool(jnp.all(jnp.isfinite(o))) for o in out)
    print("KERNEL_OK")
</pallas_src>

<mosaic_0001>
module attributes {stable_mosaic.version = 11 : i64} {
  func.func @_encoder_kernel(%arg0: memref<32x1xi32, #tpu.memory_space<vmem>>, %arg1: memref<32x1xi32, #tpu.memory_space<vmem>>, %arg2: memref<1x32xi32, #tpu.memory_space<vmem>>, %arg3: memref<1x16xi32, #tpu.memory_space<vmem>>, %arg4: memref<16x32xf32, #tpu.memory_space<vmem>>, %arg5: memref<32x32xf32, #tpu.memory_space<vmem>>, %arg6: memref<2x32xf32, #tpu.memory_space<vmem>>, %arg7: memref<2x32xf32, #tpu.memory_space<vmem>>, %arg8: memref<32x64xbf16, #tpu.memory_space<vmem>>, %arg9: memref<32x32xbf16, #tpu.memory_space<vmem>>, %arg10: memref<8x32xf32, #tpu.memory_space<vmem>>, %arg11: memref<32x64xbf16, #tpu.memory_space<vmem>>, %arg12: memref<32x32xbf16, #tpu.memory_space<vmem>>, %arg13: memref<8x32xf32, #tpu.memory_space<vmem>>, %arg14: memref<160x32xbf16, #tpu.memory_space<vmem>>, %arg15: memref<8x32xf32, #tpu.memory_space<vmem>>, %arg16: memref<2x32xf32, #tpu.memory_space<vmem>>, %arg17: memref<2x32xf32, #tpu.memory_space<vmem>>, %arg18: memref<2x32xf32, #tpu.memory_space<vmem>>) attributes {dimension_semantics = [], scalar_prefetch = 0 : i64, scratch_operands = 0 : i64, tpu.core_type = #tpu.core_type<tc>} {
    %c0 = arith.constant 0 : index
    %c0_0 = arith.constant 0 : index
    %0 = vector.load %arg4[%c0, %c0_0] : memref<16x32xf32, #tpu.memory_space<vmem>>, vector<16x32xf32>
    %c0_1 = arith.constant 0 : index
    %c0_2 = arith.constant 0 : index
    %1 = vector.load %arg5[%c0_1, %c0_2] : memref<32x32xf32, #tpu.memory_space<vmem>>, vector<32x32xf32>
    %c0_3 = arith.constant 0 : index
    %c0_4 = arith.constant 0 : index
    %2 = vector.load %arg0[%c0_3, %c0_4] : memref<32x1xi32, #tpu.memory_space<vmem>>, vector<32x1xi32>
    %c0_5 = arith.constant 0 : index
    %c0_6 = arith.constant 0 : index
    %3 = vector.load %arg1[%c0_5, %c0_6] : memref<32x1xi32, #tpu.memory_space<vmem>>, vector<32x1xi32>
    %c0_7 = arith.constant 0 : index
    %c0_8 = arith.constant 0 : index
    %4 = vector.load %arg2[%c0_7, %c0_8] : memref<1x32xi32, #tpu.memory_space<vmem>>, vector<1x32xi32>
    %c0_9 = arith.constant 0 : index
    %c0_10 = arith.constant 0 : index
    %5 = vector.load %arg3[%c0_9, %c0_10] : memref<1x16xi32, #tpu.memory_space<vmem>>, vector<1x16xi32>
    %6 = tpu.iota {dimensions = array<i32: 1>} : vector<32x16xi32>
    %7 = vector.broadcast %2 : vector<32x1xi32> to vector<32x16xi32>
    %8 = arith.cmpi eq, %7, %6 : vector<32x16xi32>
    %9 = arith.extui %8 : vector<32x16xi1> to vector<32x16xi32>
    %10 = arith.sitofp %9 : vector<32x16xi32> to vector<32x16xf32>
    %11 = vector.broadcast %3 : vector<32x1xi32> to vector<32x16xi32>
    %12 = arith.cmpi eq, %11, %6 : vector<32x16xi32>
    %13 = arith.extui %12 : vector<32x16xi1> to vector<32x16xi32>
    %14 = arith.sitofp %13 : vector<32x16xi32> to vector<32x16xf32>
    %15 = tpu.iota {dimensions = array<i32: 0>} : vector<16x32xi32>
    %16 = vector.broadcast %4 : vector<1x32xi32> to vector<16x32xi32>
    %17 = arith.cmpi eq, %16, %15 : vector<16x32xi32>
    %18 = arith.extui %17 : vector<16x32xi1> to vector<16x32xi32>
    %19 = arith.sitofp %18 : vector<16x32xi32> to vector<16x32xf32>
    %20 = tpu.iota {dimensions = array<i32: 0>} : vector<2x16xi32>
    %21 = vector.broadcast %5 : vector<1x16xi32> to vector<2x16xi32>
    %22 = arith.cmpi eq, %21, %20 : vector<2x16xi32>
    %23 = arith.extui %22 : vector<2x16xi1> to vector<2x16xi32>
    %24 = arith.sitofp %23 : vector<2x16xi32> to vector<2x16xf32>
    %25 = arith.truncf %19 : vector<16x32xf32> to vector<16x32xbf16>
    %26 = arith.truncf %10 : vector<32x16xf32> to vector<32x16xbf16>
    %cst = arith.constant dense<0.000000e+00> : vector<16x16xf32>
    %27 = tpu.matmul %25, %26, %cst {dimension_numbers = #tpu.dot_dimension_numbers<[1], [0], [0], [1], [0, 0, 1, 1], [], []>} : vector<16x32xbf16>, vector<32x16xbf16>, vector<16x16xf32> -> vector<16x16xf32>
    %28 = tpu.iota {dimensions = array<i32: 0>} : vector<16x16xi32>
    %29 = tpu.iota {dimensions = array<i32: 1>} : vector<16x16xi32>
    %30 = arith.cmpi eq, %28, %29 : vector<16x16xi32>
    %31 = arith.extui %30 : vector<16x16xi1> to vector<16x16xi32>
    %32 = arith.sitofp %31 : vector<16x16xi32> to vector<16x16xf32>
    %33 = arith.addf %27, %32 : vector<16x16xf32>
    %cst_11 = arith.constant 0.000000e+00 : f32
    %34 = vector.broadcast %cst_11 : f32 to vector<16x16xf32>
    %35 = arith.cmpf ogt, %33, %34 : vector<16x16xf32>
    %cst_12 = arith.constant dense<0.000000e+00> : vector<16xf32>
    %36 = vector.multi_reduction <add>, %27, %cst_12 [1] : vector<16x16xf32> to vector<16xf32>
    %37 = vector.shape_cast %36 : vector<16xf32> to vector<16x1xf32>
    %cst_13 = arith.constant 1.000000e+00 : f32
    %38 = vector.broadcast %cst_13 : f32 to vector<16x1xf32>
    %39 = arith.maximumf %37, %38 : vector<16x1xf32>
    %cst_14 = arith.constant 1.000000e+00 : f32
    %40 = vector.broadcast %cst_14 : f32 to vector<16x1xf32>
    %41 = arith.divf %40, %39 : vector<16x1xf32>
    %c0_15 = arith.constant 0 : index
    %c0_16 = arith.constant 0 : index
    %42 = vector.load %arg10[%c0_15, %c0_16] : memref<8x32xf32, #tpu.memory_space<vmem>>, vector<8x32xf32>
    %43 = vector.extract_strided_slice %42 {offsets = [0, 0], sizes = [1, 32], strides = [1, 1]} : vector<8x32xf32> to vector<1x32xf32>
    %44 = vector.extract_strided_slice %42 {offsets = [1, 0], sizes = [1, 32], strides = [1, 1]} : vector<8x32xf32> to vector<1x32xf32>
    %45 = vector.extract_strided_slice %42 {offsets = [2, 0], sizes = [1, 32], strides = [1, 1]} : vector<8x32xf32> to vector<1x32xf32>
    %46 = vector.extract_strided_slice %42 {offsets = [3, 0], sizes = [1, 32], strides = [1, 1]} : vector<8x32xf32> to vector<1x32xf32>
    %47 = vector.extract_strided_slice %42 {offsets = [4, 0], sizes = [1, 32], strides = [1, 1]} : vector<8x32xf32> to vector<1x32xf32>
    %c0_17 = arith.constant 0 : index
    %c0_18 = arith.constant 0 : index
    %48 = vector.load %arg8[%c0_17, %c0_18] : memref<32x64xbf16, #tpu.memory_space<vmem>>, vector<32x64xbf16>
    %49 = arith.truncf %0 : vector<16x32xf32> to vector<16x32xbf16>
    %cst_19 = arith.constant dense<0.000000e+00> : vector<16x64xf32>
    %50 = tpu.matmul %49, %48, %cst_19 {dimension_numbers = #tpu.dot_dimension_numbers<[1], [0], [0], [1], [0, 0, 1, 1], [], []>} : vector<16x32xbf16>, vector<32x64xbf16>, vector<16x64xf32> -> vector<16x64xf32>
    %51 = vector.extract_strided_slice %50 {offsets = [0, 0], sizes = [16, 32], strides = [1, 1]} : vector<16x64xf32> to vector<16x32xf32>
    %52 = vector.broadcast %43 : vector<1x32xf32> to vector<16x32xf32>
    %53 = arith.addf %51, %52 : vector<16x32xf32>
    %54 = vector.extract_strided_slice %50 {offsets = [0, 32], sizes = [16, 32], strides = [1, 1]} : vector<16x64xf32> to vector<16x32xf32>
    %55 = vector.broadcast %44 : vector<1x32xf32> to vector<16x32xf32>
    %56 = arith.addf %54, %55 : vector<16x32xf32>
    %c0_20 = arith.constant 0 : index
    %c0_21 = arith.constant 0 : index
    %57 = vector.load %arg9[%c0_20, %c0_21] : memref<32x32xbf16, #tpu.memory_space<vmem>>, vector<32x32xbf16>
    %58 = arith.truncf %1 : vector<32x32xf32> to vector<32x32xbf16>
    %cst_22 = arith.constant dense<0.000000e+00> : vector<32x32xf32>
    %59 = tpu.matmul %58, %57, %cst_22 {dimension_numbers = #tpu.dot_dimension_numbers<[1], [0], [0], [1], [0, 0, 1, 1], [], []>} : vector<32x32xbf16>, vector<32x32xbf16>, vector<32x32xf32> -> vector<32x32xf32>
    %60 = arith.truncf %19 : vector<16x32xf32> to vector<16x32xbf16>
    %61 = arith.truncf %59 : vector<32x32xf32> to vector<32x32xbf16>
    %cst_23 = arith.constant dense<0.000000e+00> : vector<16x32xf32>
    %62 = tpu.matmul %60, %61, %cst_23 {dimension_numbers = #tpu.dot_dimension_numbers<[1], [0], [0], [1], [0, 0, 1, 1], [], []>} : vector<16x32xbf16>, vector<32x32xbf16>, vector<16x32xf32> -> vector<16x32xf32>
    %63 = vector.broadcast %41 : vector<16x1xf32> to vector<16x32xf32>
    %64 = arith.mulf %62, %63 : vector<16x32xf32>
    %65 = arith.truncf %10 : vector<32x16xf32> to vector<32x16xbf16>
    %66 = arith.truncf %53 : vector<16x32xf32> to vector<16x32xbf16>
    %cst_24 = arith.constant dense<0.000000e+00> : vector<32x32xf32>
    %67 = tpu.matmul %65, %66, %cst_24 {dimension_numbers = #tpu.dot_dimension_numbers<[1], [0], [0], [1], [0, 0, 1, 1], [], []>} : vector<32x16xbf16>, vector<16x32xbf16>, vector<32x32xf32> -> vector<32x32xf32>
    %68 = arith.truncf %14 : vector<32x16xf32> to vector<32x16xbf16>
    %69 = arith.truncf %56 : vector<16x32xf32> to vector<16x32xbf16>
    %cst_25 = arith.constant dense<0.000000e+00> : vector<32x32xf32>
    %70 = tpu.matmul %68, %69, %cst_25 {dimension_numbers = #tpu.dot_dimension_numbers<[1], [0], [0], [1], [0, 0, 1, 1], [], []>} : vector<32x16xbf16>, vector<16x32xbf16>, vector<32x32xf32> -> vector<32x32xf32>
    %71 = arith.addf %67, %70 : vector<32x32xf32>
    %72 = arith.addf %71, %59 : vector<32x32xf32>
    %cst_26 = arith.constant 0.000000e+00 : f32
    %73 = vector.broadcast %cst_26 : f32 to vector<32x32xf32>
    %74 = arith.cmpf oge, %72, %73 : vector<32x32xf32>
    %cst_27 = arith.constant 2.000000e-01 : f32
    %75 = vector.broadcast %cst_27 : f32 to vector<32x32xf32>
    %76 = arith.mulf %75, %72 : vector<32x32xf32>
    %77 = arith.select %74, %72, %76 : vector<32x32xi1>, vector<32x32xf32>
    %78 = vector.broadcast %45 : vector<1x32xf32> to vector<32x32xf32>
    %79 = arith.mulf %77, %78 : vector<32x32xf32>
    %cst_28 = arith.constant dense<0.000000e+00> : vector<32xf32>
    %80 = vector.multi_reduction <add>, %79, %cst_28 [1] : vector<32x32xf32> to vector<32xf32>
    %81 = vector.shape_cast %80 : vector<32xf32> to vector<32x1xf32>
    %82 = arith.addf %53, %56 : vector<16x32xf32>
    %83 = arith.addf %82, %64 : vector<16x32xf32>
    %cst_29 = arith.constant 0.000000e+00 : f32
    %84 = vector.broadcast %cst_29 : f32 to vector<16x32xf32>
    %85 = arith.cmpf oge, %83, %84 : vector<16x32xf32>
    %cst_30 = arith.constant 2.000000e-01 : f32
    %86 = vector.broadcast %cst_30 : f32 to vector<16x32xf32>
    %87 = arith.mulf %86, %83 : vector<16x32xf32>
    %88 = arith.select %85, %83, %87 : vector<16x32xi1>, vector<16x32xf32>
    %89 = vector.broadcast %45 : vector<1x32xf32> to vector<16x32xf32>
    %90 = arith.mulf %88, %89 : vector<16x32xf32>
    %cst_31 = arith.constant dense<0.000000e+00> : vector<16xf32>
    %91 = vector.multi_reduction <add>, %90, %cst_31 [1] : vector<16x32xf32> to vector<16xf32>
    %92 = vector.shape_cast %91 : vector<16xf32> to vector<16x1xf32>
    %93 = vector.broadcast %81 : vector<32x1xf32> to vector<32x16xf32>
    %94 = arith.mulf %93, %10 : vector<32x16xf32>
    %95 = arith.truncf %19 : vector<16x32xf32> to vector<16x32xbf16>
    %96 = arith.truncf %94 : vector<32x16xf32> to vector<32x16xbf16>
    %cst_32 = arith.constant dense<0.000000e+00> : vector<16x16xf32>
    %97 = tpu.matmul %95, %96, %cst_32 {dimension_numbers = #tpu.dot_dimension_numbers<[1], [0], [0], [1], [0, 0, 1, 1], [], []>} : vector<16x32xbf16>, vector<32x16xbf16>, vector<16x16xf32> -> vector<16x16xf32>
    %98 = vector.broadcast %92 : vector<16x1xf32> to vector<16x16xf32>
    %99 = arith.mulf %32, %98 : vector<16x16xf32>
    %100 = arith.addf %97, %99 : vector<16x16xf32>
    %cst_33 = arith.constant -1.000000e+30 : f32
    %101 = vector.broadcast %cst_33 : f32 to vector<16x16xf32>
    %102 = arith.select %35, %100, %101 : vector<16x16xi1>, vector<16x16xf32>
    %cst_34 = arith.constant dense<0xFF800000> : vector<16xf32>
    %103 = vector.multi_reduction <maximumf>, %102, %cst_34 [1] : vector<16x16xf32> to vector<16xf32>
    %104 = vector.shape_cast %103 : vector<16xf32> to vector<16x1xf32>
    %105 = vector.broadcast %104 : vector<16x1xf32> to vector<16x16xf32>
    %106 = arith.subf %102, %105 : vector<16x16xf32>
    %107 = math.exp %106 : vector<16x16xf32>
    %cst_35 = arith.constant dense<0.000000e+00> : vector<16xf32>
    %108 = vector.multi_reduction <add>, %107, %cst_35 [1] : vector<16x16xf32> to vector<16xf32>
    %109 = vector.shape_cast %108 : vector<16xf32> to vector<16x1xf32>
    %110 = vector.broadcast %109 : vector<16x1xf32> to vector<16x16xf32>
    %111 = arith.divf %107, %110 : vector<16x16xf32>
    %112 = arith.truncf %111 : vector<16x16xf32> to vector<16x16xbf16>
    %113 = arith.truncf %53 : vector<16x32xf32> to vector<16x32xbf16>
    %cst_36 = arith.constant dense<0.000000e+00> : vector<16x32xf32>
    %114 = tpu.matmul %112, %113, %cst_36 {dimension_numbers = #tpu.dot_dimension_numbers<[1], [0], [0], [1], [0, 0, 1, 1], [], []>} : vector<16x16xbf16>, vector<16x32xbf16>, vector<16x32xf32> -> vector<16x32xf32>
    %115 = vector.broadcast %46 : vector<1x32xf32> to vector<16x32xf32>
    %116 = arith.mulf %114, %115 : vector<16x32xf32>
    %117 = vector.broadcast %47 : vector<1x32xf32> to vector<16x32xf32>
    %118 = arith.addf %116, %117 : vector<16x32xf32>
    %119 = math.tanh %118 : vector<16x32xf32>
    %c0_37 = arith.constant 0 : index
    %c0_38 = arith.constant 0 : index
    %120 = vector.load %arg13[%c0_37, %c0_38] : memref<8x32xf32, #tpu.memory_space<vmem>>, vector<8x32xf32>
    %121 = vector.extract_strided_slice %120 {offsets = [0, 0], sizes = [1, 32], strides = [1, 1]} : vector<8x32xf32> to vector<1x32xf32>
    %122 = vector.extract_strided_slice %120 {offsets = [1, 0], sizes = [1, 32], strides = [1, 1]} : vector<8x32xf32> to vector<1x32xf32>
    %123 = vector.extract_strided_slice %120 {offsets = [2, 0], sizes = [1, 32], strides = [1, 1]} : vector<8x32xf32> to vector<1x32xf32>
    %124 = vector.extract_strided_slice %120 {offsets = [3, 0], sizes = [1, 32], strides = [1, 1]} : vector<8x32xf32> to vector<1x32xf32>
    %125 = vector.extract_strided_slice %120 {offsets = [4, 0], sizes = [1, 32], strides = [1, 1]} : vector<8x32xf32> to vector<1x32xf32>
    %c0_39 = arith.constant 0 : index
    %c0_40 = arith.constant 0 : index
    %126 = vector.load %arg11[%c0_39, %c0_40] : memref<32x64xbf16, #tpu.memory_space<vmem>>, vector<32x64xbf16>
    %127 = arith.truncf %119 : vector<16x32xf32> to vector<16x32xbf16>
    %cst_41 = arith.constant dense<0.000000e+00> : vector<16x64xf32>
    %128 = tpu.matmul %127, %126, %cst_41 {dimension_numbers = #tpu.dot_dimension_numbers<[1], [0], [0], [1], [0, 0, 1, 1], [], []>} : vector<16x32xbf16>, vector<32x64xbf16>, vector<16x64xf32> -> vector<16x64xf32>
    %129 = vector.extract_strided_slice %128 {offsets = [0, 0], sizes = [16, 32], strides = [1, 1]} : vector<16x64xf32> to vector<16x32xf32>
    %130 = vector.broadcast %121 : vector<1x32xf32> to vector<16x32xf32>
    %131 = arith.addf %129, %130 : vector<16x32xf32>
    %132 = vector.extract_strided_slice %128 {offsets = [0, 32], sizes = [16, 32], strides = [1, 1]} : vector<16x64xf32> to vector<16x32xf32>
    %133 = vector.broadcast %122 : vector<1x32xf32> to vector<16x32xf32>
    %134 = arith.addf %132, %133 : vector<16x32xf32>
    %c0_42 = arith.constant 0 : index
    %c0_43 = arith.constant 0 : index
    %135 = vector.load %arg12[%c0_42, %c0_43] : memref<32x32xbf16, #tpu.memory_space<vmem>>, vector<32x32xbf16>
    %136 = arith.truncf %1 : vector<32x32xf32> to vector<32x32xbf16>
    %cst_44 = arith.constant dense<0.000000e+00> : vector<32x32xf32>
    %137 = tpu.matmul %136, %135, %cst_44 {dimension_numbers = #tpu.dot_dimension_numbers<[1], [0], [0], [1], [0, 0, 1, 1], [], []>} : vector<32x32xbf16>, vector<32x32xbf16>, vector<32x32xf32> -> vector<32x32xf32>
    %138 = arith.truncf %19 : vector<16x32xf32> to vector<16x32xbf16>
    %139 = arith.truncf %137 : vector<32x32xf32> to vector<32x32xbf16>
    %cst_45 = arith.constant dense<0.000000e+00> : vector<16x32xf32>
    %140 = tpu.matmul %138, %139, %cst_45 {dimension_numbers = #tpu.dot_dimension_numbers<[1], [0], [0], [1], [0, 0, 1, 1], [], []>} : vector<16x32xbf16>, vector<32x32xbf16>, vector<16x32xf32> -> vector<16x32xf32>
    %141 = vector.broadcast %41 : vector<16x1xf32> to vector<16x32xf32>
    %142 = arith.mulf %140, %141 : vector<16x32xf32>
    %143 = arith.truncf %10 : vector<32x16xf32> to vector<32x16xbf16>
    %144 = arith.truncf %131 : vector<16x32xf32> to vector<16x32xbf16>
    %cst_46 = arith.constant dense<0.000000e+00> : vector<32x32xf32>
    %145 = tpu.matmul %143, %144, %cst_46 {dimension_numbers = #tpu.dot_dimension_numbers<[1], [0], [0], [1], [0, 0, 1, 1], [], []>} : vector<32x16xbf16>, vector<16x32xbf16>, vector<32x32xf32> -> vector<32x32xf32>
    %146 = arith.truncf %14 : vector<32x16xf32> to vector<32x16xbf16>
    %147 = arith.truncf %134 : vector<16x32xf32> to vector<16x32xbf16>
    %cst_47 = arith.constant dense<0.000000e+00> : vector<32x32xf32>
    %148 = tpu.matmul %146, %147, %cst_47 {dimension_numbers = #tpu.dot_dimension_numbers<[1], [0], [0], [1], [0, 0, 1, 1], [], []>} : vector<32x16xbf16>, vector<16x32xbf16>, vector<32x32xf32> -> vector<32x32xf32>
    %149 = arith.addf %145, %148 : vector<32x32xf32>
    %150 = arith.addf %149, %137 : vector<32x32xf32>
    %cst_48 = arith.constant 0.000000e+00 : f32
    %151 = vector.broadcast %cst_48 : f32 to vector<32x32xf32>
    %152 = arith.cmpf oge, %150, %151 : vector<32x32xf32>
    %cst_49 = arith.constant 2.000000e-01 : f32
    %153 = vector.broadcast %cst_49 : f32 to vector<32x32xf32>
    %154 = arith.mulf %153, %150 : vector<32x32xf32>
    %155 = arith.select %152, %150, %154 : vector<32x32xi1>, vector<32x32xf32>
    %156 = vector.broadcast %123 : vector<1x32xf32> to vector<32x32xf32>
    %157 = arith.mulf %155, %156 : vector<32x32xf32>
    %cst_50 = arith.constant dense<0.000000e+00> : vector<32xf32>
    %158 = vector.multi_reduction <add>, %157, %cst_50 [1] : vector<32x32xf32> to vector<32xf32>
    %159 = vector.shape_cast %158 : vector<32xf32> to vector<32x1xf32>
    %160 = arith.addf %131, %134 : vector<16x32xf32>
    %161 = arith.addf %160, %142 : vector<16x32xf32>
    %cst_51 = arith.constant 0.000000e+00 : f32
    %162 = vector.broadcast %cst_51 : f32 to vector<16x32xf32>
    %163 = arith.cmpf oge, %161, %162 : vector<16x32xf32>
    %cst_52 = arith.constant 2.000000e-01 : f32
    %164 = vector.broadcast %cst_52 : f32 to vector<16x32xf32>
    %165 = arith.mulf %164, %161 : vector<16x32xf32>
    %166 = arith.select %163, %161, %165 : vector<16x32xi1>, vector<16x32xf32>
    %167 = vector.broadcast %123 : vector<1x32xf32> to vector<16x32xf32>
    %168 = arith.mulf %166, %167 : vector<16x32xf32>
    %cst_53 = arith.constant dense<0.000000e+00> : vector<16xf32>
    %169 = vector.multi_reduction <add>, %168, %cst_53 [1] : vector<16x32xf32> to vector<16xf32>
    %170 = vector.shape_cast %169 : vector<16xf32> to vector<16x1xf32>
    %171 = vector.broadcast %159 : vector<32x1xf32> to vector<32x16xf32>
    %172 = arith.mulf %171, %10 : vector<32x16xf32>
    %173 = arith.truncf %19 : vector<16x32xf32> to vector<16x32xbf16>
    %174 = arith.truncf %172 : vector<32x16xf32> to vector<32x16xbf16>
    %cst_54 = arith.constant dense<0.000000e+00> : vector<16x16xf32>
    %175 = tpu.matmul %173, %174, %cst_54 {dimension_numbers = #tpu.dot_dimension_numbers<[1], [0], [0], [1], [0, 0, 1, 1], [], []>} : vector<16x32xbf16>, vector<32x16xbf16>, vector<16x16xf32> -> vector<16x16xf32>
    %176 = vector.broadcast %170 : vector<16x1xf32> to vector<16x16xf32>
    %177 = arith.mulf %32, %176 : vector<16x16xf32>
    %178 = arith.addf %175, %177 : vector<16x16xf32>
    %cst_55 = arith.constant -1.000000e+30 : f32
    %179 = vector.broadcast %cst_55 : f32 to vector<16x16xf32>
    %180 = arith.select %35, %178, %179 : vector<16x16xi1>, vector<16x16xf32>
    %cst_56 = arith.constant dense<0xFF800000> : vector<16xf32>
    %181 = vector.multi_reduction <maximumf>, %180, %cst_56 [1] : vector<16x16xf32> to vector<16xf32>
    %182 = vector.shape_cast %181 : vector<16xf32> to vector<16x1xf32>
    %183 = vector.broadcast %182 : vector<16x1xf32> to vector<16x16xf32>
    %184 = arith.subf %180, %183 : vector<16x16xf32>
    %185 = math.exp %184 : vector<16x16xf32>
    %cst_57 = arith.constant dense<0.000000e+00> : vector<16xf32>
    %186 = vector.multi_reduction <add>, %185, %cst_57 [1] : vector<16x16xf32> to vector<16xf32>
    %187 = vector.shape_cast %186 : vector<16xf32> to vector<16x1xf32>
    %188 = vector.broadcast %187 : vector<16x1xf32> to vector<16x16xf32>
    %189 = arith.divf %185, %188 : vector<16x16xf32>
    %190 = arith.truncf %189 : vector<16x16xf32> to vector<16x16xbf16>
    %191 = arith.truncf %131 : vector<16x32xf32> to vector<16x32xbf16>
    %cst_58 = arith.constant dense<0.000000e+00> : vector<16x32xf32>
    %192 = tpu.matmul %190, %191, %cst_58 {dimension_numbers = #tpu.dot_dimension_numbers<[1], [0], [0], [1], [0, 0, 1, 1], [], []>} : vector<16x16xbf16>, vector<16x32xbf16>, vector<16x32xf32> -> vector<16x32xf32>
    %193 = vector.broadcast %124 : vector<1x32xf32> to vector<16x32xf32>
    %194 = arith.mulf %192, %193 : vector<16x32xf32>
    %195 = vector.broadcast %125 : vector<1x32xf32> to vector<16x32xf32>
    %196 = arith.addf %194, %195 : vector<16x32xf32>
    %197 = math.tanh %196 : vector<16x32xf32>
    %c0_59 = arith.constant 0 : index
    %c0_60 = arith.constant 0 : index
    %198 = vector.load %arg14[%c0_59, %c0_60] : memref<160x32xbf16, #tpu.memory_space<vmem>>, vector<160x32xbf16>
    %199 = vector.extract_strided_slice %198 {offsets = [0, 0], sizes = [32, 32], strides = [1, 1]} : vector<160x32xbf16> to vector<32x32xbf16>
    %200 = vector.extract_strided_slice %198 {offsets = [32, 0], sizes = [32, 32], strides = [1, 1]} : vector<160x32xbf16> to vector<32x32xbf16>
    %201 = vector.extract_strided_slice %198 {offsets = [64, 0], sizes = [32, 32], strides = [1, 1]} : vector<160x32xbf16> to vector<32x32xbf16>
    %202 = vector.extract_strided_slice %198 {offsets = [96, 0], sizes = [32, 32], strides = [1, 1]} : vector<160x32xbf16> to vector<32x32xbf16>
    %203 = vector.extract_strided_slice %198 {offsets = [128, 0], sizes = [32, 32], strides = [1, 1]} : vector<160x32xbf16> to vector<32x32xbf16>
    %c0_61 = arith.constant 0 : index
    %c0_62 = arith.constant 0 : index
    %204 = vector.load %arg15[%c0_61, %c0_62] : memref<8x32xf32, #tpu.memory_space<vmem>>, vector<8x32xf32>
    %205 = vector.extract_strided_slice %204 {offsets = [0, 0], sizes = [1, 32], strides = [1, 1]} : vector<8x32xf32> to vector<1x32xf32>
    %206 = vector.extract_strided_slice %204 {offsets = [1, 0], sizes = [1, 32], strides = [1, 1]} : vector<8x32xf32> to vector<1x32xf32>
    %207 = vector.extract_strided_slice %204 {offsets = [2, 0], sizes = [1, 32], strides = [1, 1]} : vector<8x32xf32> to vector<1x32xf32>
    %208 = vector.extract_strided_slice %204 {offsets = [3, 0], sizes = [1, 32], strides = [1, 1]} : vector<8x32xf32> to vector<1x32xf32>
    %209 = vector.extract_strided_slice %204 {offsets = [4, 0], sizes = [1, 32], strides = [1, 1]} : vector<8x32xf32> to vector<1x32xf32>
    %210 = vector.extract_strided_slice %204 {offsets = [5, 0], sizes = [1, 32], strides = [1, 1]} : vector<8x32xf32> to vector<1x32xf32>
    %211 = vector.extract_strided_slice %204 {offsets = [6, 0], sizes = [1, 32], strides = [1, 1]} : vector<8x32xf32> to vector<1x32xf32>
    %212 = arith.truncf %197 : vector<16x32xf32> to vector<16x32xbf16>
    %cst_63 = arith.constant dense<0.000000e+00> : vector<16x32xf32>
    %213 = tpu.matmul %212, %199, %cst_63 {dimension_numbers = #tpu.dot_dimension_numbers<[1], [0], [0], [1], [0, 0, 1, 1], [], []>} : vector<16x32xbf16>, vector<32x32xbf16>, vector<16x32xf32> -> vector<16x32xf32>
    %214 = vector.broadcast %205 : vector<1x32xf32> to vector<16x32xf32>
    %215 = arith.addf %213, %214 : vector<16x32xf32>
    %216 = math.tanh %215 : vector<16x32xf32>
    %217 = arith.truncf %216 : vector<16x32xf32> to vector<16x32xbf16>
    %cst_64 = arith.constant dense<0.000000e+00> : vector<16x32xf32>
    %218 = tpu.matmul %217, %200, %cst_64 {dimension_numbers = #tpu.dot_dimension_numbers<[1], [0], [0], [1], [0, 0, 1, 1], [], []>} : vector<16x32xbf16>, vector<32x32xbf16>, vector<16x32xf32> -> vector<16x32xf32>
    %219 = vector.broadcast %206 : vector<1x32xf32> to vector<16x32xf32>
    %220 = arith.addf %218, %219 : vector<16x32xf32>
    %cst_65 = arith.constant dense<0xFF800000> : vector<32xf32>
    %221 = vector.multi_reduction <maximumf>, %220, %cst_65 [0] : vector<16x32xf32> to vector<32xf32>
    %222 = vector.shape_cast %221 : vector<32xf32> to vector<1x32xf32>
    %223 = vector.broadcast %222 : vector<1x32xf32> to vector<16x32xf32>
    %224 = arith.subf %220, %223 : vector<16x32xf32>
    %225 = math.exp %224 : vector<16x32xf32>
    %226 = arith.mulf %225, %197 : vector<16x32xf32>
    %227 = arith.truncf %24 : vector<2x16xf32> to vector<2x16xbf16>
    %228 = arith.truncf %226 : vector<16x32xf32> to vector<16x32xbf16>
    %cst_66 = arith.constant dense<0.000000e+00> : vector<2x32xf32>
    %229 = tpu.matmul %227, %228, %cst_66 {dimension_numbers = #tpu.dot_dimension_numbers<[1], [0], [0], [1], [0, 0, 1, 1], [], []>} : vector<2x16xbf16>, vector<16x32xbf16>, vector<2x32xf32> -> vector<2x32xf32>
    %230 = arith.truncf %24 : vector<2x16xf32> to vector<2x16xbf16>
    %231 = arith.truncf %225 : vector<16x32xf32> to vector<16x32xbf16>
    %cst_67 = arith.constant dense<0.000000e+00> : vector<2x32xf32>
    %232 = tpu.matmul %230, %231, %cst_67 {dimension_numbers = #tpu.dot_dimension_numbers<[1], [0], [0], [1], [0, 0, 1, 1], [], []>} : vector<2x16xbf16>, vector<16x32xbf16>, vector<2x32xf32> -> vector<2x32xf32>
    %cst_68 = arith.constant 9.99999996E-13 : f32
    %233 = vector.broadcast %cst_68 : f32 to vector<2x32xf32>
    %234 = arith.maximumf %232, %233 : vector<2x32xf32>
    %235 = arith.divf %229, %234 : vector<2x32xf32>
    %236 = arith.truncf %235 : vector<2x32xf32> to vector<2x32xbf16>
    %cst_69 = arith.constant dense<0.000000e+00> : vector<2x32xf32>
    %237 = tpu.matmul %236, %201, %cst_69 {dimension_numbers = #tpu.dot_dimension_numbers<[1], [0], [0], [1], [0, 0, 1, 1], [], []>} : vector<2x32xbf16>, vector<32x32xbf16>, vector<2x32xf32> -> vector<2x32xf32>
    %238 = vector.broadcast %207 : vector<1x32xf32> to vector<2x32xf32>
    %239 = arith.addf %237, %238 : vector<2x32xf32>
    %240 = arith.mulf %239, %239 : vector<2x32xf32>
    %cst_70 = arith.constant dense<0.000000e+00> : vector<2xf32>
    %241 = vector.multi_reduction <add>, %240, %cst_70 [1] : vector<2x32xf32> to vector<2xf32>
    %242 = vector.shape_cast %241 : vector<2xf32> to vector<2x1xf32>
    %cst_71 = arith.constant 1.000000e-24 : f32
    %243 = vector.broadcast %cst_71 : f32 to vector<2x1xf32>
    %244 = arith.maximumf %242, %243 : vector<2x1xf32>
    %245 = math.rsqrt %244 : vector<2x1xf32>
    %246 = vector.broadcast %245 : vector<2x1xf32> to vector<2x32xf32>
    %247 = arith.mulf %239, %246 : vector<2x32xf32>
    %c0_72 = arith.constant 0 : index
    %c0_73 = arith.constant 0 : index
    %248 = vector.load %arg16[%c0_72, %c0_73] : memref<2x32xf32, #tpu.memory_space<vmem>>, vector<2x32xf32>
    tpu.vector_store %arg16[%c0_72, %c0_73], %247 {strides = array<i32>} : memref<2x32xf32, #tpu.memory_space<vmem>>, vector<2x32xf32>,
    %c0_74 = arith.constant 0 : index
    %c0_75 = arith.constant 0 : index
    %249 = vector.load %arg6[%c0_74, %c0_75] : memref<2x32xf32, #tpu.memory_space<vmem>>, vector<2x32xf32>
    %250 = arith.truncf %249 : vector<2x32xf32> to vector<2x32xbf16>
    %cst_76 = arith.constant dense<0.000000e+00> : vector<2x32xf32>
    %251 = tpu.matmul %250, %202, %cst_76 {dimension_numbers = #tpu.dot_dimension_numbers<[1], [0], [0], [1], [0, 0, 1, 1], [], []>} : vector<2x32xbf16>, vector<32x32xbf16>, vector<2x32xf32> -> vector<2x32xf32>
    %252 = vector.broadcast %208 : vector<1x32xf32> to vector<2x32xf32>
    %253 = arith.mulf %251, %252 : vector<2x32xf32>
    %254 = vector.broadcast %209 : vector<1x32xf32> to vector<2x32xf32>
    %255 = arith.addf %253, %254 : vector<2x32xf32>
    %256 = math.tanh %255 : vector<2x32xf32>
    %257 = arith.mulf %256, %256 : vector<2x32xf32>
    %cst_77 = arith.constant dense<0.000000e+00> : vector<2xf32>
    %258 = vector.multi_reduction <add>, %257, %cst_77 [1] : vector<2x32xf32> to vector<2xf32>
    %259 = vector.shape_cast %258 : vector<2xf32> to vector<2x1xf32>
    %cst_78 = arith.constant 1.000000e-24 : f32
    %260 = vector.broadcast %cst_78 : f32 to vector<2x1xf32>
    %261 = arith.maximumf %259, %260 : vector<2x1xf32>
    %262 = math.rsqrt %261 : vector<2x1xf32>
    %263 = vector.broadcast %262 : vector<2x1xf32> to vector<2x32xf32>
    %264 = arith.mulf %256, %263 : vector<2x32xf32>
    %c0_79 = arith.constant 0 : index
    %c0_80 = arith.constant 0 : index
    %265 = vector.load %arg17[%c0_79, %c0_80] : memref<2x32xf32, #tpu.memory_space<vmem>>, vector<2x32xf32>
    tpu.vector_store %arg17[%c0_79, %c0_80], %264 {strides = array<i32>} : memref<2x32xf32, #tpu.memory_space<vmem>>, vector<2x32xf32>,
    %c0_81 = arith.constant 0 : index
    %c0_82 = arith.constant 0 : index
    %266 = vector.load %arg7[%c0_81, %c0_82] : memref<2x32xf32, #tpu.memory_space<vmem>>, vector<2x32xf32>
    %267 = arith.truncf %266 : vector<2x32xf32> to vector<2x32xbf16>
    %cst_83 = arith.constant dense<0.000000e+00> : vector<2x32xf32>
    %268 = tpu.matmul %267, %203, %cst_83 {dimension_numbers = #tpu.dot_dimension_numbers<[1], [0], [0], [1], [0, 0, 1, 1], [], []>} : vector<2x32xbf16>, vector<32x32xbf16>, vector<2x32xf32> -> vector<2x32xf32>
    %269 = vector.broadcast %210 : vector<1x32xf32> to vector<2x32xf32>
    %270 = arith.mulf %268, %269 : vector<2x32xf32>
    %271 = vector.broadcast %211 : vector<1x32xf32> to vector<2x32xf32>
    %272 = arith.addf %270, %271 : vector<2x32xf32>
    %273 = math.tanh %272 : vector<2x32xf32>
    %274 = arith.mulf %273, %273 : vector<2x32xf32>
    %cst_84 = arith.constant dense<0.000000e+00> : vector<2xf32>
    %275 = vector.multi_reduction <add>, %274, %cst_84 [1] : vector<2x32xf32> to vector<2xf32>
    %276 = vector.shape_cast %275 : vector<2xf32> to vector<2x1xf32>
    %cst_85 = arith.constant 1.000000e-24 : f32
    %277 = vector.broadcast %cst_85 : f32 to vector<2x1xf32>
    %278 = arith.maximumf %276, %277 : vector<2x1xf32>
    %279 = math.rsqrt %278 : vector<2x1xf32>
    %280 = vector.broadcast %279 : vector<2x1xf32> to vector<2x32xf32>
    %281 = arith.mulf %273, %280 : vector<2x32xf32>
    %c0_86 = arith.constant 0 : index
    %c0_87 = arith.constant 0 : index
    %282 = vector.load %arg18[%c0_86, %c0_87] : memref<2x32xf32, #tpu.memory_space<vmem>>, vector<2x32xf32>
    tpu.vector_store %arg18[%c0_86, %c0_87], %281 {strides = array<i32>} : memref<2x32xf32, #tpu.memory_space<vmem>>, vector<2x32xf32>,
    return
  }
}

</mosaic_0001>

<llo_original>
// kernel: encoder_forward.1
$region0: #{encoder_forward.1}
  #allocation0 [shape = 'u32[]', space=smem, size = 0x4, offset = 0x4, fixed_abs, tag = 'smem constant byte address 0x4 - core index']
  #allocation1 [shape = 'u32[144,128]{1,0:T(1,128)}', space=vmem, size = 0x12000, scoped, tag = 'internal scratch']
  %s0 = inlined_call_operand.vmem [shape: s32[32,1], index: 0, kind: input, shape index: {}]
  %s1 = inlined_call_operand.vmem [shape: s32[32,1], index: 1, kind: input, shape index: {}]
  %s2 = inlined_call_operand.vmem [shape: s32[1,32], index: 2, kind: input, shape index: {}]
  %s3 = inlined_call_operand.vmem [shape: s32[1,16], index: 3, kind: input, shape index: {}]
  %s4 = inlined_call_operand.vmem [shape: f32[16,32], index: 4, kind: input, shape index: {}]
  %s5 = inlined_call_operand.vmem [shape: f32[32,32], index: 5, kind: input, shape index: {}]
  %s6 = inlined_call_operand.vmem [shape: f32[2,32], index: 6, kind: input, shape index: {}]
  %s7 = inlined_call_operand.vmem [shape: f32[2,32], index: 7, kind: input, shape index: {}]
  %s8 = inlined_call_operand.vmem [shape: bf16[32,64], index: 8, kind: input, shape index: {}]
  %s9 = inlined_call_operand.vmem [shape: bf16[32,32], index: 9, kind: input, shape index: {}]
  %s10 = inlined_call_operand.vmem [shape: f32[8,32], index: 10, kind: input, shape index: {}]
  %s11 = inlined_call_operand.vmem [shape: bf16[32,64], index: 11, kind: input, shape index: {}]
  %s12 = inlined_call_operand.vmem [shape: bf16[32,32], index: 12, kind: input, shape index: {}]
  %s13 = inlined_call_operand.vmem [shape: f32[8,32], index: 13, kind: input, shape index: {}]
  %s14 = inlined_call_operand.vmem [shape: bf16[160,32], index: 14, kind: input, shape index: {}]
  %s15 = inlined_call_operand.vmem [shape: f32[8,32], index: 15, kind: input, shape index: {}]
  %s16 = inlined_call_operand.hbm [shape: f32[2,32], index: 16, kind: output, shape index: {0}]
  %s17 = inlined_call_operand.hbm [shape: f32[2,32], index: 17, kind: output, shape index: {1}]
  %s18 = inlined_call_operand.hbm [shape: f32[2,32], index: 18, kind: output, shape index: {2}]
  %19 = xla_tuple %s16, %s17, %s18
  %s20 = sld [smem:[#allocation0]]
  $region90: #{encoder_forward.1} parent=0
    _
  %s22 = ssub.s32 1, %s20
  %s23 = scalar_select 0, %s22, %s20
  $region1: #{encoder_forward.1} parent=0
    #allocation2 [shape = 'u8[1024]{0}', space=vmem, size = 0x400, scoped, tag = 'output window, operand 0, single buffered']
    #allocation3 [shape = 's32[1]{0}', space=sflag, size = 0x4, scoped, tag = 'scoped memory for encoder_forward.1']
    #allocation4 [shape = 'u8[1024]{0}', space=vmem, size = 0x400, scoped, tag = 'output window, operand 1, single buffered']
    #allocation5 [shape = 's32[1]{0}', space=sflag, size = 0x4, scoped, tag = 'scoped memory for encoder_forward.1']
    #allocation6 [shape = 'u8[1024]{0}', space=vmem, size = 0x400, scoped, tag = 'output window, operand 2, single buffered']
    %24 = vsyncpa [#allocation3], 0
    %25 = vsyncpa [#allocation5], 0
    // Predicated region
    $region2: #{encoder_forward.1} parent=1 // pred_check
      _
    $region3: #{encoder_forward.1} parent=1 // pred_check_branch
      %27 = sbr.rel (0) target = $region5
    $region4: #{encoder_forward.1} parent=1 // pred_region
      _
    $region5: #{encoder_forward.1} parent=1 // pred_fallthru
      _
    // Predicated region
    $region6: #{encoder_forward.1} parent=1 // pred_check
      _
    $region7: #{encoder_forward.1} parent=1 // pred_check_branch
      %29 = sbr.rel (0) target = $region9
    $region8: #{encoder_forward.1} parent=1 // pred_region
      _
    $region9: #{encoder_forward.1} parent=1 // pred_fallthru
      _
    // Predicated region
    $region10: #{encoder_forward.1} parent=1 // pred_check
      _
    $region11: #{encoder_forward.1} parent=1 // pred_check_branch
      %31 = sbr.rel (0) target = $region13
    $region12: #{encoder_forward.1} parent=1 // pred_region
      _
    $region13: #{encoder_forward.1} parent=1 // pred_fallthru
      _
    // Predicated region
    $region14: #{encoder_forward.1} parent=1 // pred_check
      _
    $region15: #{encoder_forward.1} parent=1 // pred_check_branch
      %33 = sbr.rel (0) target = $region17
    $region16: #{encoder_forward.1} parent=1 // pred_region
      _
    $region17: #{encoder_forward.1} parent=1 // pred_fallthru
      _
    // Predicated region
    $region18: #{encoder_forward.1} parent=1 // pred_check
      _
    $region19: #{encoder_forward.1} parent=1 // pred_check_branch
      %35 = sbr.rel (0) target = $region21
    $region20: #{encoder_forward.1} parent=1 // pred_region
      _
    $region21: #{encoder_forward.1} parent=1 // pred_fallthru
      _
    // Predicated region
    $region22: #{encoder_forward.1} parent=1 // pred_check
      _
    $region23: #{encoder_forward.1} parent=1 // pred_check_branch
      %37 = sbr.rel (0) target = $region25
    $region24: #{encoder_forward.1} parent=1 // pred_region
      _
    $region25: #{encoder_forward.1} parent=1 // pred_fallthru
      _
    // Predicated region
    $region26: #{encoder_forward.1} parent=1 // pred_check
      _
    $region27: #{encoder_forward.1} parent=1 // pred_check_branch
      %39 = sbr.rel (0) target = $region29
    $region28: #{encoder_forward.1} parent=1 // pred_region
      _
    $region29: #{encoder_forward.1} parent=1 // pred_fallthru
      _
    // Predicated region
    $region30: #{encoder_forward.1} parent=1 // pred_check
      _
    $region31: #{encoder_forward.1} parent=1 // pred_check_branch
      %41 = sbr.rel (0) target = $region33
    $region32: #{encoder_forward.1} parent=1 // pred_region
      _
    $region33: #{encoder_forward.1} parent=1 // pred_fallthru
      _
    // Predicated region
    $region34: #{encoder_forward.1} parent=1 // pred_check
      _
    $region35: #{encoder_forward.1} parent=1 // pred_check_branch
      %43 = sbr.rel (0) target = $region37
    $region36: #{encoder_forward.1} parent=1 // pred_region
      _
    $region37: #{encoder_forward.1} parent=1 // pred_fallthru
      _
    // Predicated region
    $region38: #{encoder_forward.1} parent=1 // pred_check
      _
    $region39: #{encoder_forward.1} parent=1 // pred_check_branch
      %45 = sbr.rel (0) target = $region41
    $region40: #{encoder_forward.1} parent=1 // pred_region
      _
    $region41: #{encoder_forward.1} parent=1 // pred_fallthru
      _
    // Predicated region
    $region42: #{encoder_forward.1} parent=1 // pred_check
      _
    $region43: #{encoder_forward.1} parent=1 // pred_check_branch
      %47 = sbr.rel (0) target = $region45
    $region44: #{encoder_forward.1} parent=1 // pred_region
      _
    $region45: #{encoder_forward.1} parent=1 // pred_fallthru
      _
    // Predicated region
    $region46: #{encoder_forward.1} parent=1 // pred_check
      _
    $region47: #{encoder_forward.1} parent=1 // pred_check_branch
      %49 = sbr.rel (0) target = $region49
    $region48: #{encoder_forward.1} parent=1 // pred_region
      _
    $region49: #{encoder_forward.1} parent=1 // pred_fallthru
      _
    // Predicated region
    $region50: #{encoder_forward.1} parent=1 // pred_check
      _
    $region51: #{encoder_forward.1} parent=1 // pred_check_branch
      %51 = sbr.rel (0) target = $region53
    $region52: #{encoder_forward.1} parent=1 // pred_region
      _
    $region53: #{encoder_forward.1} parent=1 // pred_fallthru
      _
    // Predicated region
    $region54: #{encoder_forward.1} parent=1 // pred_check
      _
    $region55: #{encoder_forward.1} parent=1 // pred_check_branch
      %53 = sbr.rel (0) target = $region57
    $region56: #{encoder_forward.1} parent=1 // pred_region
      _
    $region57: #{encoder_forward.1} parent=1 // pred_fallthru
      _
    // Predicated region
    $region58: #{encoder_forward.1} parent=1 // pred_check
      _
    $region59: #{encoder_forward.1} parent=1 // pred_check_branch
      %55 = sbr.rel (0) target = $region61
    $region60: #{encoder_forward.1} parent=1 // pred_region
      _
    $region61: #{encoder_forward.1} parent=1 // pred_fallthru
      _
    // Predicated region
    $region62: #{encoder_forward.1} parent=1 // pred_check
      _
    $region63: #{encoder_forward.1} parent=1 // pred_check_branch
      %57 = sbr.rel (0) target = $region65
    $region64: #{encoder_forward.1} parent=1 // pred_region
      _
    $region65: #{encoder_forward.1} parent=1 // pred_fallthru
      _
    %v59 = vld [vmem:[%s4] sm:$0xff]
    %v60 = vld [vmem:[%s4 + $0x8] sm:$0xff]
    %v61 = vld [vmem:[%s5] sm:$0xff]
    %v62 = vld [vmem:[%s5 + $0x8] sm:$0xff]
    %v63 = vld [vmem:[%s5 + $0x10] sm:$0xff]
    %v64 = vld [vmem:[%s5 + $0x18] sm:$0xff]
    %v65 = vld [vmem:[%s0] sm:$0xff]
    %v66 = vld [vmem:[%s0 + $0x8] sm:$0xff]
    %v67 = vld [vmem:[%s0 + $0x10] sm:$0xff]
    %v68 = vld [vmem:[%s0 + $0x18] sm:$0xff]
    %v69 = vld [vmem:[%s1] sm:$0xff]
    %v70 = vld [vmem:[%s1 + $0x8] sm:$0xff]
    %v71 = vld [vmem:[%s1 + $0x10] sm:$0xff]
    %v72 = vld [vmem:[%s1 + $0x18] sm:$0xff]
    %v73 = vld [vmem:[%s2] sm:$0x1]
    %v74 = vld [vmem:[%s3] sm:$0x1]
    %v75 = vlaneseq
    %v76 = vand.u32 %v75, 127
    %77 = vset.pattern.permute.xlu0 0
    %78 = vperm.xlu0 %77, %v65
    %v79 = vpop.permute.xlu0 %78
    %80 = vset.pattern.permute.xlu0 0
    %81 = vperm.xlu0 %80, %v66
    %v82 = vpop.permute.xlu0 %81
    %83 = vset.pattern.permute.xlu0 0
    %84 = vperm.xlu0 %83, %v67
    %v85 = vpop.permute.xlu0 %84
    %86 = vset.pattern.permute.xlu0 0
    %87 = vperm.xlu0 %86, %v68
    %v88 = vpop.permute.xlu0 %87
    %vm89 = vcmp.eq.s32.totalorder %v79, %v76
    %vm90 = vcmp.eq.s32.totalorder %v82, %v76
    %vm91 = vcmp.eq.s32.totalorder %v85, %v76
    %vm92 = vcmp.eq.s32.totalorder %v88, %v76
    %v93 = vsel %vm89, 1, 0
    %v94 = vsel %vm90, 1, 0
    %v95 = vsel %vm91, 1, 0
    %v96 = vsel %vm92, 1, 0
    %v97 = vcvt.s32.f32 %v93
    %v98 = vcvt.s32.f32 %v94
    %v99 = vcvt.s32.f32 %v95
    %v100 = vcvt.s32.f32 %v96
    %101 = vset.pattern.permute.xlu0 0
    %102 = vperm.xlu0 %101, %v69
    %v103 = vpop.permute.xlu0 %102
    %104 = vset.pattern.permute.xlu0 0
    %105 = vperm.xlu0 %104, %v70
    %v106 = vpop.permute.xlu0 %105
    %107 = vset.pattern.permute.xlu0 0
    %108 = vperm.xlu0 %107, %v71
    %v109 = vpop.permute.xlu0 %108
    %110 = vset.pattern.permute.xlu0 0
    %111 = vperm.xlu0 %110, %v72
    %v112 = vpop.permute.xlu0 %111
    %vm113 = vcmp.eq.s32.totalorder %v103, %v76
    %vm114 = vcmp.eq.s32.totalorder %v106, %v76
    %vm115 = vcmp.eq.s32.totalorder %v109, %v76
    %vm116 = vcmp.eq.s32.totalorder %v112, %v76
    %v117 = vlaneseq
    %v118 = vshrl.u32 %v117, 7
    %v119 = vadd.s32 %v118, 8
    %v120 = vlaneseq
    %v121 = vshrl.u32 %v120, 7
    %v122 = vsub.s32 0, %v121
    %v123 = vrot.slane %v73, %v122
    %vm124 = vcmp.eq.s32.totalorder %v123, %v118
    %vm125 = vcmp.eq.s32.totalorder %v123, %v119
    %v126 = vlaneseq
    %v127 = vshrl.u32 %v126, 7
    %v128 = vsub.s32 0, %v127
    %v129 = vrot.slane %v74, %v128
    %vm130 = vcmp.eq.s32.totalorder %v129, %v118
    %v131 = vsel %vm124, 1, 0
    %v132 = vsel %vm125, 1, 0
    %v133 = vcvt.s32.f32 %v131
    %v134 = vcvt.s32.f32 %v132
    %v135 = vpack.c.bf16 %v134, %v133
    %v136 = vpack.c.bf16 %v98, %v97
    %v137 = vpack.c.bf16 %v100, %v99
    %vm138 = vcmask 261120
    %v140 = vsel %vm138, %v135, 0
    %142 = vmatprep.subr.bf16.mxu0 0
    %143 = vmatpush1.bf16.msra.mxu0 %v136
    %144 = vmatprep.subr.bf16.mxu0 0
    %145 = vmatpush1.bf16.msra.mxu0 %v137
    %146 = vmatprep.subr.bf16.mxu0 0
    %147 = vmatpush1.bf16.msra.mxu0 0
    %148 = vmatprep.subr.bf16.mxu0 0
    %149 = vmatpush1.bf16.msra.mxu0 0
    %150 = vmatprep.subr.bf16.mxu0 0
    %151 = vmatpush1.bf16.msra.mxu0 0
    %152 = vmatprep.subr.bf16.mxu0 0
    %153 = vmatpush1.bf16.msra.mxu0 0
    %154 = vmatprep.subr.bf16.mxu0 0
    %155 = vmatpush1.bf16.msra.mxu0 0
    %156 = vmatprep.subr.bf16.mxu0 0
    %157 = vmatpush1.bf16.msra.mxu0 0
    %158 = vmatprep.subr.bf16.mxu0 0
    %159 = vmatpush1.bf16.msra.mxu0 0
    %160 = vmatprep.subr.bf16.mxu0 0
    %161 = vmatpush1.bf16.msra.mxu0 0
    %162 = vmatprep.subr.bf16.mxu0 0
    %163 = vmatpush1.bf16.msra.mxu0 0
    %164 = vmatprep.subr.bf16.mxu0 0
    %165 = vmatpush1.bf16.msra.mxu0 0
    %166 = vmatprep.subr.bf16.mxu0 0
    %167 = vmatpush1.bf16.msra.mxu0 0
    %168 = vmatprep.subr.bf16.mxu0 0
    %169 = vmatpush1.bf16.msra.mxu0 0
    %170 = vmatprep.subr.bf16.mxu0 0
    %171 = vmatpush1.bf16.msra.mxu0 0
    %172 = vmatprep.subr.bf16.mxu0 0
    %173 = vmatpush1.bf16.msra.mxu0 0
    %174 = vmatprep.mubr.bf16.mxu0 0
    %175 = vmatmul.mubr.bf16.gmra.mrb[0].mxu0 %v140
    %v176 = vpop.f32.mrb[0].mxu0
    %v177 = vadd.f32 0.0, %v176
    %v178 = vpop.f32.mrb[0].mxu0
    %v179 = vpop.f32.mrb[0].mxu0
    %v180 = vadd.f32 0.0, %v179
    %v181 = vpop.f32.mrb[0].mxu0
    %182 = vdwg.mxu0
    %vm183 = vcmp.eq.s32.totalorder %v118, %v76
    %vm184 = vcmp.eq.s32.totalorder %v119, %v76
    %v185 = vsel %vm183, 1, 0
    %v186 = vsel %vm184, 1, 0
    %v187 = vcvt.s32.f32 %v185
    %v188 = vcvt.s32.f32 %v186
    %v189 = vadd.f32 %v177, %v187
    %v190 = vadd.f32 %v180, %v188
    %vm191 = vcmp.gt.f32.partialorder %v189, 0.0
    %vm192 = vcmp.gt.f32.partialorder %v190, 0.0
    %vm193 = vcmask 130048
    %v194 = vsel %vm193, %v177, 0.0
    %195 = vadd.xlane.f32.xlu0 %v194
    %v196 = vpop.xlane.xlu0 %195
    %v197 = vsel %vm193, %v180, 0.0
    %198 = vadd.xlane.f32.xlu0 %v197
    %v199 = vpop.xlane.xlu0 %198
    %v200 = vmax.f32 %v196, 1.0
    %v201 = vmax.f32 %v199, 1.0
    %v202 = vrcp.pop %v200
    %v203 = vmul.f32 1.0, %v202
    %v204 = vrcp.pop %v201
    %v205 = vmul.f32 1.0, %v204
    %v206 = vld [vmem:[%s10] sm:$0xff]
    %v207 = vld [vmem:[%s8] sm:$0xf]
    %v208 = vld [vmem:[%s8 + $0x4] sm:$0xf]
    %v209 = vld [vmem:[%s8 + $0x8] sm:$0xf]
    %v210 = vld [vmem:[%s8 + $0xc] sm:$0xf]
    %v211 = vpack.c.bf16 %v60, %v59
    %v216 = vunpack.c.l.b16 %v207
    %v217 = vunpack.c.l.b16 %v208
    %v218 = vunpack.c.l.b16 %v209
    %v219 = vunpack.c.l.b16 %v210
    %v220 = vpack.c.b16 %v217, %v216
    %v221 = vpack.c.b16 %v219, %v218
    %v225 = vsel %vm138, %v211, 0
    %227 = vmatprep.subr.bf16.mxu0 0
    %228 = vmatpush1.bf16.msra.mxu0 %v220
    %229 = vmatprep.subr.bf16.mxu0 0
    %230 = vmatpush1.bf16.msra.mxu0 %v221
    %231 = vmatprep.subr.bf16.mxu0 0
    %232 = vmatpush1.bf16.msra.mxu0 0
    %233 = vmatprep.subr.bf16.mxu0 0
    %234 = vmatpush1.bf16.msra.mxu0 0
    %235 = vmatprep.subr.bf16.mxu0 0
    %236 = vmatpush1.bf16.msra.mxu0 0
    %237 = vmatprep.subr.bf16.mxu0 0
    %238 = vmatpush1.bf16.msra.mxu0 0
    %239 = vmatprep.subr.bf16.mxu0 0
    %240 = vmatpush1.bf16.msra.mxu0 0
    %241 = vmatprep.subr.bf16.mxu0 0
    %242 = vmatpush1.bf16.msra.mxu0 0
    %243 = vmatprep.subr.bf16.mxu0 0
    %244 = vmatpush1.bf16.msra.mxu0 0
    %245 = vmatprep.subr.bf16.mxu0 0
    %246 = vmatpush1.bf16.msra.mxu0 0
    %247 = vmatprep.subr.bf16.mxu0 0
    %248 = vmatpush1.bf16.msra.mxu0 0
    %249 = vmatprep.subr.bf16.mxu0 0
    %250 = vmatpush1.bf16.msra.mxu0 0
    %251 = vmatprep.subr.bf16.mxu0 0
    %252 = vmatpush1.bf16.msra.mxu0 0
    %253 = vmatprep.subr.bf16.mxu0 0
    %254 = vmatpush1.bf16.msra.mxu0 0
    %255 = vmatprep.subr.bf16.mxu0 0
    %256 = vmatpush1.bf16.msra.mxu0 0
    %257 = vmatprep.subr.bf16.mxu0 0
    %258 = vmatpush1.bf16.msra.mxu0 0
    %259 = vmatprep.mubr.bf16.mxu0 0
    %260 = vmatmul.mubr.bf16.gmra.mrb[0].mxu0 %v225
    %v261 = vpop.f32.mrb[0].mxu0
    %v262 = vadd.f32 0.0, %v261
    %v263 = vpop.f32.mrb[0].mxu0
    %v264 = vpop.f32.mrb[0].mxu0
    %v265 = vadd.f32 0.0, %v264
    %v266 = vpop.f32.mrb[0].mxu0
    %267 = vdwg.mxu0
    %v268 = vlaneseq
    %v269 = vshrl.u32 %v268, 7
    %v270 = vsub.s32 0, %v269
    %v271 = vrot.slane %v206, %v270
    %v272 = vadd.f32 %v262, %v271
    %v273 = vadd.f32 %v265, %v271
    %v274 = vlaneseq
    %v275 = vshrl.u32 %v274, 7
    %v276 = vsub.s32 1, %v275
    %v277 = vrot.slane %v206, %v276
    %279 = vrot.lane.b32.xlu0 %v277, 32
    %v280 = vpop.permute.xlu0 %279
    %v282 = vadd.f32 %v262, %v280
    %v283 = vadd.f32 %v265, %v280
    %v284 = vld [vmem:[%s9] sm:$0xf]
    %v285 = vld [vmem:[%s9 + $0x4] sm:$0xf]
    %v286 = vld [vmem:[%s9 + $0x8] sm:$0xf]
    %v287 = vld [vmem:[%s9 + $0xc] sm:$0xf]
    %v288 = vpack.c.bf16 %v62, %v61
    %v289 = vpack.c.bf16 %v64, %v63
    %v294 = vunpack.c.l.b16 %v284
    %v295 = vunpack.c.l.b16 %v285
    %v296 = vunpack.c.l.b16 %v286
    %v297 = vunpack.c.l.b16 %v287
    %v298 = vpack.c.b16 %v295, %v294
    %v299 = vpack.c.b16 %v297, %v296
    %v303 = vsel %vm138, %v288, 0
    %v306 = vsel %vm138, %v289, 0
    %308 = vmatprep.subr.bf16.mxu0 0
    %309 = vmatpush1.bf16.msra.mxu0 %v298
    %310 = vmatprep.subr.bf16.mxu0 0
    %311 = vmatpush1.bf16.msra.mxu0 %v299
    %312 = vmatprep.subr.bf16.mxu0 0
    %313 = vmatpush1.bf16.msra.mxu0 0
    %314 = vmatprep.subr.bf16.mxu0 0
    %315 = vmatpush1.bf16.msra.mxu0 0
    %316 = vmatprep.subr.bf16.mxu0 0
    %317 = vmatpush1.bf16.msra.mxu0 0
    %318 = vmatprep.subr.bf16.mxu0 0
    %319 = vmatpush1.bf16.msra.mxu0 0
    %320 = vmatprep.subr.bf16.mxu0 0
    %321 = vmatpush1.bf16.msra.mxu0 0
    %322 = vmatprep.subr.bf16.mxu0 0
    %323 = vmatpush1.bf16.msra.mxu0 0
    %324 = vmatprep.subr.bf16.mxu0 0
    %325 = vmatpush1.bf16.msra.mxu0 0
    %326 = vmatprep.subr.bf16.mxu0 0
    %327 = vmatpush1.bf16.msra.mxu0 0
    %328 = vmatprep.subr.bf16.mxu0 0
    %329 = vmatpush1.bf16.msra.mxu0 0
    %330 = vmatprep.subr.bf16.mxu0 0
    %331 = vmatpush1.bf16.msra.mxu0 0
    %332 = vmatprep.subr.bf16.mxu0 0
    %333 = vmatpush1.bf16.msra.mxu0 0
    %334 = vmatprep.subr.bf16.mxu0 0
    %335 = vmatpush1.bf16.msra.mxu0 0
    %336 = vmatprep.subr.bf16.mxu0 0
    %337 = vmatpush1.bf16.msra.mxu0 0
    %338 = vmatprep.subr.bf16.mxu0 0
    %339 = vmatpush1.bf16.msra.mxu0 0
    %340 = vmatprep.mubr.bf16.mxu0 0
    %341 = vmatmul.mubr.bf16.gmra.mrb[0].mxu0 %v303
    %v342 = vpop.f32.mrb[0].mxu0
    %v343 = vadd.f32 0.0, %v342
    %v344 = vpop.f32.mrb[0].mxu0
    %v345 = vpop.f32.mrb[0].mxu0
    %v346 = vadd.f32 0.0, %v345
    %v347 = vpop.f32.mrb[0].mxu0
    %348 = vmatprep.mubr.bf16.mxu0 0
    %349 = vmatmul.mubr.bf16.gmra.mrb[0].mxu0 %v306
    %v350 = vpop.f32.mrb[0].mxu0
    %v351 = vadd.f32 0.0, %v350
    %v352 = vpop.f32.mrb[0].mxu0
    %v353 = vpop.f32.mrb[0].mxu0
    %v354 = vadd.f32 0.0, %v353
    %v355 = vpop.f32.mrb[0].mxu0
    %356 = vdwg.mxu0
    %v357 = vpack.c.bf16 %v346, %v343
    %v358 = vpack.c.bf16 %v354, %v351
    %359 = vmatprep.subr.bf16.mxu0 0
    %360 = vmatpush1.bf16.msra.mxu0 %v357
    %361 = vmatprep.subr.bf16.mxu0 0
    %362 = vmatpush1.bf16.msra.mxu0 %v358
    %363 = vmatprep.subr.bf16.mxu0 0
    %364 = vmatpush1.bf16.msra.mxu0 0
    %365 = vmatprep.subr.bf16.mxu0 0
    %366 = vmatpush1.bf16.msra.mxu0 0
    %367 = vmatprep.subr.bf16.mxu0 0
    %368 = vmatpush1.bf16.msra.mxu0 0
    %369 = vmatprep.subr.bf16.mxu0 0
    %370 = vmatpush1.bf16.msra.mxu0 0
    %371 = vmatprep.subr.bf16.mxu0 0
    %372 = vmatpush1.bf16.msra.mxu0 0
    %373 = vmatprep.subr.bf16.mxu0 0
    %374 = vmatpush1.bf16.msra.mxu0 0
    %375 = vmatprep.subr.bf16.mxu0 0
    %376 = vmatpush1.bf16.msra.mxu0 0
    %377 = vmatprep.subr.bf16.mxu0 0
    %378 = vmatpush1.bf16.msra.mxu0 0
    %379 = vmatprep.subr.bf16.mxu0 0
    %380 = vmatpush1.bf16.msra.mxu0 0
    %381 = vmatprep.subr.bf16.mxu0 0
    %382 = vmatpush1.bf16.msra.mxu0 0
    %383 = vmatprep.subr.bf16.mxu0 0
    %384 = vmatpush1.bf16.msra.mxu0 0
    %385 = vmatprep.subr.bf16.mxu0 0
    %386 = vmatpush1.bf16.msra.mxu0 0
    %387 = vmatprep.subr.bf16.mxu0 0
    %388 = vmatpush1.bf16.msra.mxu0 0
    %389 = vmatprep.subr.bf16.mxu0 0
    %390 = vmatpush1.bf16.msra.mxu0 0
    %391 = vmatprep.mubr.bf16.mxu0 0
    %392 = vmatmul.mubr.bf16.gmra.mrb[0].mxu0 %v140
    %v393 = vpop.f32.mrb[0].mxu0
    %v394 = vadd.f32 0.0, %v393
    %v395 = vpop.f32.mrb[0].mxu0
    %v396 = vpop.f32.mrb[0].mxu0
    %v397 = vadd.f32 0.0, %v396
    %v398 = vpop.f32.mrb[0].mxu0
    %399 = vdwg.mxu0
    %v400 = vmul.f32 %v394, %v203
    %v401 = vmul.f32 %v397, %v205
    %v402 = vpack.c.bf16 %v273, %v272
    %v403 = vsel %vm113, 1, 0
    %v404 = vsel %vm114, 1, 0
    %v405 = vsel %vm115, 1, 0
    %v406 = vsel %vm116, 1, 0
    %v407 = vcvt.s32.f32 %v403
    %v408 = vcvt.s32.f32 %v404
    %v409 = vcvt.s32.f32 %v405
    %v410 = vcvt.s32.f32 %v406
    %v411 = vpack.c.bf16 %v408, %v407
    %v412 = vpack.c.bf16 %v410, %v409
    %v413 = vpack.c.bf16 %v283, %v282
    %415 = vrot.lane.b32.xlu0 %v413, 96
    %v416 = vpop.permute.xlu0 %415
    %v419 = vsel %vm193, %v411, 0
    %v422 = vsel %vm193, %v412, 0
    %424 = vmatprep.subr.bf16.mxu0 0
    %425 = vmatpush1.bf16.msra.mxu0 %v416
    %426 = vmatprep.subr.bf16.mxu0 0
    %427 = vmatpush1.bf16.msra.mxu0 0
    %428 = vmatprep.subr.bf16.mxu0 0
    %429 = vmatpush1.bf16.msra.mxu0 0
    %430 = vmatprep.subr.bf16.mxu0 0
    %431 = vmatpush1.bf16.msra.mxu0 0
    %432 = vmatprep.subr.bf16.mxu0 0
    %433 = vmatpush1.bf16.msra.mxu0 0
    %434 = vmatprep.subr.bf16.mxu0 0
    %435 = vmatpush1.bf16.msra.mxu0 0
    %436 = vmatprep.subr.bf16.mxu0 0
    %437 = vmatpush1.bf16.msra.mxu0 0
    %438 = vmatprep.subr.bf16.mxu0 0
    %439 = vmatpush1.bf16.msra.mxu0 0
    %440 = vmatprep.subr.bf16.mxu0 0
    %441 = vmatpush1.bf16.msra.mxu0 0
    %442 = vmatprep.subr.bf16.mxu0 0
    %443 = vmatpush1.bf16.msra.mxu0 0
    %444 = vmatprep.subr.bf16.mxu0 0
    %445 = vmatpush1.bf16.msra.mxu0 0
    %446 = vmatprep.subr.bf16.mxu0 0
    %447 = vmatpush1.bf16.msra.mxu0 0
    %448 = vmatprep.subr.bf16.mxu0 0
    %449 = vmatpush1.bf16.msra.mxu0 0
    %450 = vmatprep.subr.bf16.mxu0 0
    %451 = vmatpush1.bf16.msra.mxu0 0
    %452 = vmatprep.subr.bf16.mxu0 0
    %453 = vmatpush1.bf16.msra.mxu0 0
    %454 = vmatprep.subr.bf16.mxu0 0
    %455 = vmatpush1.bf16.msra.mxu0 0
    %456 = vmatprep.mubr.bf16.mxu0 0
    %457 = vmatmul.mubr.bf16.gmra.mrb[0].mxu0 %v419
    %v458 = vpop.f32.mrb[0].mxu0
    %v459 = vadd.f32 0.0, %v458
    %v460 = vpop.f32.mrb[0].mxu0
    %v461 = vpop.f32.mrb[0].mxu0
    %v462 = vadd.f32 0.0, %v461
    %v463 = vpop.f32.mrb[0].mxu0
    %464 = vmatprep.mubr.bf16.mxu0 0
    %465 = vmatmul.mubr.bf16.gmra.mrb[0].mxu0 %v422
    %v466 = vpop.f32.mrb[0].mxu0
    %v467 = vadd.f32 0.0, %v466
    %v468 = vpop.f32.mrb[0].mxu0
    %v469 = vpop.f32.mrb[0].mxu0
    %v470 = vadd.f32 0.0, %v469
    %v471 = vpop.f32.mrb[0].mxu0
    %472 = vdwg.mxu0
    %v474 = vsel %vm193, %v136, 0
    %v477 = vsel %vm193, %v137, 0
    %479 = vmatprep.subr.bf16.mxu0 0
    %480 = vmatpush1.bf16.msra.mxu0 %v402
    %481 = vmatprep.subr.bf16.mxu0 0
    %482 = vmatpush1.bf16.msra.mxu0 0
    %483 = vmatprep.subr.bf16.mxu0 0
    %484 = vmatpush1.bf16.msra.mxu0 0
    %485 = vmatprep.subr.bf16.mxu0 0
    %486 = vmatpush1.bf16.msra.mxu0 0
    %487 = vmatprep.subr.bf16.mxu0 0
    %488 = vmatpush1.bf16.msra.mxu0 0
    %489 = vmatprep.subr.bf16.mxu0 0
    %490 = vmatpush1.bf16.msra.mxu0 0
    %491 = vmatprep.subr.bf16.mxu0 0
    %492 = vmatpush1.bf16.msra.mxu0 0
    %493 = vmatprep.subr.bf16.mxu0 0
    %494 = vmatpush1.bf16.msra.mxu0 0
    %495 = vmatprep.subr.bf16.mxu0 0
    %496 = vmatpush1.bf16.msra.mxu0 0
    %497 = vmatprep.subr.bf16.mxu0 0
    %498 = vmatpush1.bf16.msra.mxu0 0
    %499 = vmatprep.subr.bf16.mxu0 0
    %500 = vmatpush1.bf16.msra.mxu0 0
    %501 = vmatprep.subr.bf16.mxu0 0
    %502 = vmatpush1.bf16.msra.mxu0 0
    %503 = vmatprep.subr.bf16.mxu0 0
    %504 = vmatpush1.bf16.msra.mxu0 0
    %505 = vmatprep.subr.bf16.mxu0 0
    %506 = vmatpush1.bf16.msra.mxu0 0
    %507 = vmatprep.subr.bf16.mxu0 0
    %508 = vmatpush1.bf16.msra.mxu0 0
    %509 = vmatprep.subr.bf16.mxu0 0
    %510 = vmatpush1.bf16.msra.mxu0 0
    %511 = vmatprep.mubr.bf16.mxu0 0
    %512 = vmatmul.mubr.bf16.gmra.mrb[0].mxu0 %v474
    %v513 = vpop.f32.mrb[0].mxu0
    %v514 = vadd.f32 %v459, %v513
    %v515 = vpop.f32.mrb[0].mxu0
    %v516 = vpop.f32.mrb[0].mxu0
    %v517 = vadd.f32 %v462, %v516
    %v518 = vpop.f32.mrb[0].mxu0
    %519 = vmatprep.mubr.bf16.mxu0 0
    %520 = vmatmul.mubr.bf16.gmra.mrb[0].mxu0 %v477
    %v521 = vpop.f32.mrb[0].mxu0
    %v522 = vadd.f32 %v467, %v521
    %v523 = vpop.f32.mrb[0].mxu0
    %v524 = vpop.f32.mrb[0].mxu0
    %v525 = vadd.f32 %v470, %v524
    %v526 = vpop.f32.mrb[0].mxu0
    %527 = vdwg.mxu0
    %v528 = vadd.f32 %v514, %v343
    %v529 = vadd.f32 %v517, %v346
    %v530 = vadd.f32 %v522, %v351
    %v531 = vadd.f32 %v525, %v354
    %vm532 = vcmp.ge.f32.partialorder %v528, 0.0
    %vm533 = vcmp.ge.f32.partialorder %v529, 0.0
    %vm534 = vcmp.ge.f32.partialorder %v530, 0.0
    %vm535 = vcmp.ge.f32.partialorder %v531, 0.0
    %v536 = vmul.f32 %v528, 0.2
    %v537 = vmul.f32 %v529, 0.2
    %v538 = vmul.f32 %v530, 0.2
    %v539 = vmul.f32 %v531, 0.2
    %v540 = vsel %vm532, %v528, %v536
    %v541 = vsel %vm533, %v529, %v537
    %v542 = vsel %vm534, %v530, %v538
    %v543 = vsel %vm535, %v531, %v539
    %v544 = vlaneseq
    %v545 = vshrl.u32 %v544, 7
    %v546 = vsub.s32 2, %v545
    %v547 = vrot.slane %v206, %v546
    %v548 = vmul.f32 %v540, %v547
    %v549 = vmul.f32 %v541, %v547
    %v550 = vmul.f32 %v542, %v547
    %v551 = vmul.f32 %v543, %v547
    %v552 = vsel %vm138, %v548, 0.0
    %553 = vadd.xlane.f32.xlu0 %v552
    %v554 = vpop.xlane.xlu0 %553
    %v555 = vsel %vm138, %v549, 0.0
    %556 = vadd.xlane.f32.xlu0 %v555
    %v557 = vpop.xlane.xlu0 %556
    %v558 = vsel %vm138, %v550, 0.0
    %559 = vadd.xlane.f32.xlu0 %v558
    %v560 = vpop.xlane.xlu0 %559
    %v561 = vsel %vm138, %v551, 0.0
    %562 = vadd.xlane.f32.xlu0 %v561
    %v563 = vpop.xlane.xlu0 %562
    %566 = vrot.lane.b32.xlu0 %v282, 96
    %v567 = vpop.permute.xlu0 %566
    %568 = vrot.lane.b32.xlu0 %v283, 96
    %v569 = vpop.permute.xlu0 %568
    %v572 = vadd.f32 %v272, %v567
    %v573 = vadd.f32 %v273, %v569
    %v574 = vadd.f32 %v572, %v400
    %v575 = vadd.f32 %v573, %v401
    %vm576 = vcmp.ge.f32.partialorder %v574, 0.0
    %vm577 = vcmp.ge.f32.partialorder %v575, 0.0
    %v578 = vmul.f32 %v574, 0.2
    %v579 = vmul.f32 %v575, 0.2
    %v580 = vsel %vm576, %v574, %v578
    %v581 = vsel %vm577, %v575, %v579
    %v582 = vmul.f32 %v580, %v547
    %v583 = vmul.f32 %v581, %v547
    %v584 = vsel %vm138, %v582, 0.0
    %585 = vadd.xlane.f32.xlu0 %v584
    %v586 = vpop.xlane.xlu0 %585
    %v587 = vsel %vm138, %v583, 0.0
    %588 = vadd.xlane.f32.xlu0 %v587
    %v589 = vpop.xlane.xlu0 %588
    %v590 = vmul.f32 %v554, %v97
    %v591 = vmul.f32 %v557, %v98
    %v592 = vmul.f32 %v560, %v99
    %v593 = vmul.f32 %v563, %v100
    %v594 = vpack.c.bf16 %v591, %v590
    %v595 = vpack.c.bf16 %v593, %v592
    %v596 = vmul.f32 %v187, %v586
    %v597 = vmul.f32 %v188, %v589
    %598 = vmatprep.subr.bf16.mxu0 0
    %599 = vmatpush1.bf16.msra.mxu0 %v594
    %600 = vmatprep.subr.bf16.mxu0 0
    %601 = vmatpush1.bf16.msra.mxu0 %v595
    %602 = vmatprep.subr.bf16.mxu0 0
    %603 = vmatpush1.bf16.msra.mxu0 0
    %604 = vmatprep.subr.bf16.mxu0 0
    %605 = vmatpush1.bf16.msra.mxu0 0
    %606 = vmatprep.subr.bf16.mxu0 0
    %607 = vmatpush1.bf16.msra.mxu0 0
    %608 = vmatprep.subr.bf16.mxu0 0
    %609 = vmatpush1.bf16.msra.mxu0 0
    %610 = vmatprep.subr.bf16.mxu0 0
    %611 = vmatpush1.bf16.msra.mxu0 0
    %612 = vmatprep.subr.bf16.mxu0 0
    %613 = vmatpush1.bf16.msra.mxu0 0
    %614 = vmatprep.subr.bf16.mxu0 0
    %615 = vmatpush1.bf16.msra.mxu0 0
    %616 = vmatprep.subr.bf16.mxu0 0
    %617 = vmatpush1.bf16.msra.mxu0 0
    %618 = vmatprep.subr.bf16.mxu0 0
    %619 = vmatpush1.bf16.msra.mxu0 0
    %620 = vmatprep.subr.bf16.mxu0 0
    %621 = vmatpush1.bf16.msra.mxu0 0
    %622 = vmatprep.subr.bf16.mxu0 0
    %623 = vmatpush1.bf16.msra.mxu0 0
    %624 = vmatprep.subr.bf16.mxu0 0
    %625 = vmatpush1.bf16.msra.mxu0 0
    %626 = vmatprep.subr.bf16.mxu0 0
    %627 = vmatpush1.bf16.msra.mxu0 0
    %628 = vmatprep.subr.bf16.mxu0 0
    %629 = vmatpush1.bf16.msra.mxu0 0
    %630 = vmatprep.mubr.bf16.mxu0 0
    %631 = vmatmul.mubr.bf16.gmra.mrb[0].mxu0 %v140
    %v632 = vpop.f32.mrb[0].mxu0
    %v633 = vadd.f32 %v596, %v632
    %v634 = vpop.f32.mrb[0].mxu0
    %v635 = vpop.f32.mrb[0].mxu0
    %v636 = vadd.f32 %v597, %v635
    %v637 = vpop.f32.mrb[0].mxu0
    %638 = vdwg.mxu0
    %v639 = vsel %vm191, %v633, -1e+30
    %v640 = vsel %vm192, %v636, -1e+30
    %v641 = vsel %vm193, %v639, -inf
    %642 = vmax.xlane.f32.xlu0 %v641
    %v643 = vpop.xlane.xlu0 %642
    %v644 = vsel %vm193, %v640, -inf
    %645 = vmax.xlane.f32.xlu0 %v644
    %v646 = vpop.xlane.xlu0 %645
    %v647 = vsub.f32 %v639, %v643
    %v648 = vsub.f32 %v640, %v646
    %v649 = vmul.f32 %v647, 1.442695
    %v650 = vpow.pop %v649
    %v651 = vmul.f32 %v648, 1.442695
    %v652 = vpow.pop %v651
    %v653 = vsel %vm193, %v650, 0.0
    %654 = vadd.xlane.f32.xlu0 %v653
    %v655 = vpop.xlane.xlu0 %654
    %v656 = vsel %vm193, %v652, 0.0
    %657 = vadd.xlane.f32.xlu0 %v656
    %v658 = vpop.xlane.xlu0 %657
    %v659 = vrcp.pop %v655
    %v660 = vmul.f32 %v650, %v659
    %v661 = vrcp.pop %v658
    %v662 = vmul.f32 %v652, %v661
    %v663 = vpack.c.bf16 %v662, %v660
    %v665 = vsel %vm193, %v663, 0
    %667 = vmatprep.subr.bf16.mxu0 0
    %668 = vmatpush1.bf16.msra.mxu0 %v402
    %669 = vmatprep.subr.bf16.mxu0 0
    %670 = vmatpush1.bf16.msra.mxu0 0
    %671 = vmatprep.subr.bf16.mxu0 0
    %672 = vmatpush1.bf16.msra.mxu0 0
    %673 = vmatprep.subr.bf16.mxu0 0
    %674 = vmatpush1.bf16.msra.mxu0 0
    %675 = vmatprep.subr.bf16.mxu0 0
    %676 = vmatpush1.bf16.msra.mxu0 0
    %677 = vmatprep.subr.bf16.mxu0 0
    %678 = vmatpush1.bf16.msra.mxu0 0
    %679 = vmatprep.subr.bf16.mxu0 0
    %680 = vmatpush1.bf16.msra.mxu0 0
    %681 = vmatprep.subr.bf16.mxu0 0
    %682 = vmatpush1.bf16.msra.mxu0 0
    %683 = vmatprep.subr.bf16.mxu0 0
    %684 = vmatpush1.bf16.msra.mxu0 0
    %685 = vmatprep.subr.bf16.mxu0 0
    %686 = vmatpush1.bf16.msra.mxu0 0
    %687 = vmatprep.subr.bf16.mxu0 0
    %688 = vmatpush1.bf16.msra.mxu0 0
    %689 = vmatprep.subr.bf16.mxu0 0
    %690 = vmatpush1.bf16.msra.mxu0 0
    %691 = vmatprep.subr.bf16.mxu0 0
    %692 = vmatpush1.bf16.msra.mxu0 0
    %693 = vmatprep.subr.bf16.mxu0 0
    %694 = vmatpush1.bf16.msra.mxu0 0
    %695 = vmatprep.subr.bf16.mxu0 0
    %696 = vmatpush1.bf16.msra.mxu0 0
    %697 = vmatprep.subr.bf16.mxu0 0
    %698 = vmatpush1.bf16.msra.mxu0 0
    %699 = vmatprep.mubr.bf16.mxu0 0
    %700 = vmatmul.mubr.bf16.gmra.mrb[0].mxu0 %v665
    %v701 = vpop.f32.mrb[0].mxu0
    %v702 = vadd.f32 0.0, %v701
    %v703 = vpop.f32.mrb[0].mxu0
    %v704 = vpop.f32.mrb[0].mxu0
    %v705 = vadd.f32 0.0, %v704
    %v706 = vpop.f32.mrb[0].mxu0
    %707 = vdwg.mxu0
    %v708 = vlaneseq
    %v709 = vshrl.u32 %v708, 7
    %v710 = vsub.s32 3, %v709
    %v711 = vrot.slane %v206, %v710
    %v712 = vmul.f32 %v702, %v711
    %v713 = vmul.f32 %v705, %v711
    %v714 = vlaneseq
    %v715 = vshrl.u32 %v714, 7
    %v716 = vsub.s32 4, %v715
    %v717 = vrot.slane %v206, %v716
    %v718 = vadd.f32 %v712, %v717
    %v719 = vadd.f32 %v713, %v717
    %v720 = vtanh.pop %v718
    %v721 = vtanh.pop %v719
    %v722 = vld [vmem:[%s13] sm:$0xff]
    %v723 = vld [vmem:[%s11] sm:$0xf]
    %v724 = vld [vmem:[%s11 + $0x4] sm:$0xf]
    %v725 = vld [vmem:[%s11 + $0x8] sm:$0xf]
    %v726 = vld [vmem:[%s11 + $0xc] sm:$0xf]
    %v727 = vpack.c.bf16 %v721, %v720
    %v732 = vunpack.c.l.b16 %v723
    %v733 = vunpack.c.l.b16 %v724
    %v734 = vunpack.c.l.b16 %v725
    %v735 = vunpack.c.l.b16 %v726
    %v736 = vpack.c.b16 %v733, %v732
    %v737 = vpack.c.b16 %v735, %v734
    %v741 = vsel %vm138, %v727, 0
    %743 = vmatprep.subr.bf16.mxu0 0
    %744 = vmatpush1.bf16.msra.mxu0 %v736
    %745 = vmatprep.subr.bf16.mxu0 0
    %746 = vmatpush1.bf16.msra.mxu0 %v737
    %747 = vmatprep.subr.bf16.mxu0 0
    %748 = vmatpush1.bf16.msra.mxu0 0
    %749 = vmatprep.subr.bf16.mxu0 0
    %750 = vmatpush1.bf16.msra.mxu0 0
    %751 = vmatprep.subr.bf16.mxu0 0
    %752 = vmatpush1.bf16.msra.mxu0 0
    %753 = vmatprep.subr.bf16.mxu0 0
    %754 = vmatpush1.bf16.msra.mxu0 0
    %755 = vmatprep.subr.bf16.mxu0 0
    %756 = vmatpush1.bf16.msra.mxu0 0
    %757 = vmatprep.subr.bf16.mxu0 0
    %758 = vmatpush1.bf16.msra.mxu0 0
    %759 = vmatprep.subr.bf16.mxu0 0
    %760 = vmatpush1.bf16.msra.mxu0 0
    %761 = vmatprep.subr.bf16.mxu0 0
    %762 = vmatpush1.bf16.msra.mxu0 0
    %763 = vmatprep.subr.bf16.mxu0 0
    %764 = vmatpush1.bf16.msra.mxu0 0
    %765 = vmatprep.subr.bf16.mxu0 0
    %766 = vmatpush1.bf16.msra.mxu0 0
    %767 = vmatprep.subr.bf16.mxu0 0
    %768 = vmatpush1.bf16.msra.mxu0 0
    %769 = vmatprep.subr.bf16.mxu0 0
    %770 = vmatpush1.bf16.msra.mxu0 0
    %771 = vmatprep.subr.bf16.mxu0 0
    %772 = vmatpush1.bf16.msra.mxu0 0
    %773 = vmatprep.subr.bf16.mxu0 0
    %774 = vmatpush1.bf16.msra.mxu0 0
    %775 = vmatprep.mubr.bf16.mxu0 0
    %776 = vmatmul.mubr.bf16.gmra.mrb[0].mxu0 %v741
    %v777 = vpop.f32.mrb[0].mxu0
    %v778 = vadd.f32 0.0, %v777
    %v779 = vpop.f32.mrb[0].mxu0
    %v780 = vpop.f32.mrb[0].mxu0
    %v781 = vadd.f32 0.0, %v780
    %v782 = vpop.f32.mrb[0].mxu0
    %783 = vdwg.mxu0
    %v784 = vlaneseq
    %v785 = vshrl.u32 %v784, 7
    %v786 = vsub.s32 0, %v785
    %v787 = vrot.slane %v722, %v786
    %v788 = vadd.f32 %v778, %v787
    %v789 = vadd.f32 %v781, %v787
    %v790 = vlaneseq
    %v791 = vshrl.u32 %v790, 7
    %v792 = vsub.s32 1, %v791
    %v793 = vrot.slane %v722, %v792
    %795 = vrot.lane.b32.xlu0 %v793, 32
    %v796 = vpop.permute.xlu0 %795
    %v798 = vadd.f32 %v778, %v796
    %v799 = vadd.f32 %v781, %v796
    %v800 = vld [vmem:[%s12] sm:$0xf]
    %v801 = vld [vmem:[%s12 + $0x4] sm:$0xf]
    %v802 = vld [vmem:[%s12 + $0x8] sm:$0xf]
    %v803 = vld [vmem:[%s12 + $0xc] sm:$0xf]
    %v808 = vunpack.c.l.b16 %v800
    %v809 = vunpack.c.l.b16 %v801
    %v810 = vunpack.c.l.b16 %v802
    %v811 = vunpack.c.l.b16 %v803
    %v812 = vpack.c.b16 %v809, %v808
    %v813 = vpack.c.b16 %v811, %v810
    %816 = vmatprep.subr.bf16.mxu0 0
    %817 = vmatpush1.bf16.msra.mxu0 %v812
    %818 = vmatprep.subr.bf16.mxu0 0
    %819 = vmatpush1.bf16.msra.mxu0 %v813
    %820 = vmatprep.subr.bf16.mxu0 0
    %821 = vmatpush1.bf16.msra.mxu0 0
    %822 = vmatprep.subr.bf16.mxu0 0
    %823 = vmatpush1.bf16.msra.mxu0 0
    %824 = vmatprep.subr.bf16.mxu0 0
    %825 = vmatpush1.bf16.msra.mxu0 0
    %826 = vmatprep.subr.bf16.mxu0 0
    %827 = vmatpush1.bf16.msra.mxu0 0
    %828 = vmatprep.subr.bf16.mxu0 0
    %829 = vmatpush1.bf16.msra.mxu0 0
    %830 = vmatprep.subr.bf16.mxu0 0
    %831 = vmatpush1.bf16.msra.mxu0 0
    %832 = vmatprep.subr.bf16.mxu0 0
    %833 = vmatpush1.bf16.msra.mxu0 0
    %834 = vmatprep.subr.bf16.mxu0 0
    %835 = vmatpush1.bf16.msra.mxu0 0
    %836 = vmatprep.subr.bf16.mxu0 0
    %837 = vmatpush1.bf16.msra.mxu0 0
    %838 = vmatprep.subr.bf16.mxu0 0
    %839 = vmatpush1.bf16.msra.mxu0 0
    %840 = vmatprep.subr.bf16.mxu0 0
    %841 = vmatpush1.bf16.msra.mxu0 0
    %842 = vmatprep.subr.bf16.mxu0 0
    %843 = vmatpush1.bf16.msra.mxu0 0
    %844 = vmatprep.subr.bf16.mxu0 0
    %845 = vmatpush1.bf16.msra.mxu0 0
    %846 = vmatprep.subr.bf16.mxu0 0
    %847 = vmatpush1.bf16.msra.mxu0 0
    %848 = vmatprep.mubr.bf16.mxu0 0
    %849 = vmatmul.mubr.bf16.gmra.mrb[0].mxu0 %v303
    %v850 = vpop.f32.mrb[0].mxu0
    %v851 = vadd.f32 0.0, %v850
    %v852 = vpop.f32.mrb[0].mxu0
    %v853 = vpop.f32.mrb[0].mxu0
    %v854 = vadd.f32 0.0, %v853
    %v855 = vpop.f32.mrb[0].mxu0
    %856 = vmatprep.mubr.bf16.mxu0 0
    %857 = vmatmul.mubr.bf16.gmra.mrb[0].mxu0 %v306
    %v858 = vpop.f32.mrb[0].mxu0
    %v859 = vadd.f32 0.0, %v858
    %v860 = vpop.f32.mrb[0].mxu0
    %v861 = vpop.f32.mrb[0].mxu0
    %v862 = vadd.f32 0.0, %v861
    %v863 = vpop.f32.mrb[0].mxu0
    %864 = vdwg.mxu0
    %v865 = vpack.c.bf16 %v854, %v851
    %v866 = vpack.c.bf16 %v862, %v859
    %867 = vmatprep.subr.bf16.mxu0 0
    %868 = vmatpush1.bf16.msra.mxu0 %v865
    %869 = vmatprep.subr.bf16.mxu0 0
    %870 = vmatpush1.bf16.msra.mxu0 %v866
    %871 = vmatprep.subr.bf16.mxu0 0
    %872 = vmatpush1.bf16.msra.mxu0 0
    %873 = vmatprep.subr.bf16.mxu0 0
    %874 = vmatpush1.bf16.msra.mxu0 0
    %875 = vmatprep.subr.bf16.mxu0 0
    %876 = vmatpush1.bf16.msra.mxu0 0
    %877 = vmatprep.subr.bf16.mxu0 0
    %878 = vmatpush1.bf16.msra.mxu0 0
    %879 = vmatprep.subr.bf16.mxu0 0
    %880 = vmatpush1.bf16.msra.mxu0 0
    %881 = vmatprep.subr.bf16.mxu0 0
    %882 = vmatpush1.bf16.msra.mxu0 0
    %883 = vmatprep.subr.bf16.mxu0 0
    %884 = vmatpush1.bf16.msra.mxu0 0
    %885 = vmatprep.subr.bf16.mxu0 0
    %886 = vmatpush1.bf16.msra.mxu0 0
    %887 = vmatprep.subr.bf16.mxu0 0
    %888 = vmatpush1.bf16.msra.mxu0 0
    %889 = vmatprep.subr.bf16.mxu0 0
    %890 = vmatpush1.bf16.msra.mxu0 0
    %891 = vmatprep.subr.bf16.mxu0 0
    %892 = vmatpush1.bf16.msra.mxu0 0
    %893 = vmatprep.subr.bf16.mxu0 0
    %894 = vmatpush1.bf16.msra.mxu0 0
    %895 = vmatprep.subr.bf16.mxu0 0
    %896 = vmatpush1.bf16.msra.mxu0 0
    %897 = vmatprep.subr.bf16.mxu0 0
    %898 = vmatpush1.bf16.msra.mxu0 0
    %899 = vmatprep.mubr.bf16.mxu0 0
    %900 = vmatmul.mubr.bf16.gmra.mrb[0].mxu0 %v140
    %v901 = vpop.f32.mrb[0].mxu0
    %v902 = vadd.f32 0.0, %v901
    %v903 = vpop.f32.mrb[0].mxu0
    %v904 = vpop.f32.mrb[0].mxu0
    %v905 = vadd.f32 0.0, %v904
    %v906 = vpop.f32.mrb[0].mxu0
    %907 = vdwg.mxu0
    %v908 = vmul.f32 %v902, %v203
    %v909 = vmul.f32 %v905, %v205
    %v910 = vpack.c.bf16 %v789, %v788
    %v911 = vpack.c.bf16 %v799, %v798
    %913 = vrot.lane.b32.xlu0 %v911, 96
    %v914 = vpop.permute.xlu0 %913
    %916 = vmatprep.subr.bf16.mxu0 0
    %917 = vmatpush1.bf16.msra.mxu0 %v914
    %918 = vmatprep.subr.bf16.mxu0 0
    %919 = vmatpush1.bf16.msra.mxu0 0
    %920 = vmatprep.subr.bf16.mxu0 0
    %921 = vmatpush1.bf16.msra.mxu0 0
    %922 = vmatprep.subr.bf16.mxu0 0
    %923 = vmatpush1.bf16.msra.mxu0 0
    %924 = vmatprep.subr.bf16.mxu0 0
    %925 = vmatpush1.bf16.msra.mxu0 0
    %926 = vmatprep.subr.bf16.mxu0 0
    %927 = vmatpush1.bf16.msra.mxu0 0
    %928 = vmatprep.subr.bf16.mxu0 0
    %929 = vmatpush1.bf16.msra.mxu0 0
    %930 = vmatprep.subr.bf16.mxu0 0
    %931 = vmatpush1.bf16.msra.mxu0 0
    %932 = vmatprep.subr.bf16.mxu0 0
    %933 = vmatpush1.bf16.msra.mxu0 0
    %934 = vmatprep.subr.bf16.mxu0 0
    %935 = vmatpush1.bf16.msra.mxu0 0
    %936 = vmatprep.subr.bf16.mxu0 0
    %937 = vmatpush1.bf16.msra.mxu0 0
    %938 = vmatprep.subr.bf16.mxu0 0
    %939 = vmatpush1.bf16.msra.mxu0 0
    %940 = vmatprep.subr.bf16.mxu0 0
    %941 = vmatpush1.bf16.msra.mxu0 0
    %942 = vmatprep.subr.bf16.mxu0 0
    %943 = vmatpush1.bf16.msra.mxu0 0
    %944 = vmatprep.subr.bf16.mxu0 0
    %945 = vmatpush1.bf16.msra.mxu0 0
    %946 = vmatprep.subr.bf16.mxu0 0
    %947 = vmatpush1.bf16.msra.mxu0 0
    %948 = vmatprep.mubr.bf16.mxu0 0
    %949 = vmatmul.mubr.bf16.gmra.mrb[0].mxu0 %v419
    %v950 = vpop.f32.mrb[0].mxu0
    %v951 = vadd.f32 0.0, %v950
    %v952 = vpop.f32.mrb[0].mxu0
    %v953 = vpop.f32.mrb[0].mxu0
    %v954 = vadd.f32 0.0, %v953
    %v955 = vpop.f32.mrb[0].mxu0
    %956 = vmatprep.mubr.bf16.mxu0 0
    %957 = vmatmul.mubr.bf16.gmra.mrb[0].mxu0 %v422
    %v958 = vpop.f32.mrb[0].mxu0
    %v959 = vadd.f32 0.0, %v958
    %v960 = vpop.f32.mrb[0].mxu0
    %v961 = vpop.f32.mrb[0].mxu0
    %v962 = vadd.f32 0.0, %v961
    %v963 = vpop.f32.mrb[0].mxu0
    %964 = vdwg.mxu0
    %965 = vmatprep.subr.bf16.mxu0 0
    %966 = vmatpush1.bf16.msra.mxu0 %v910
    %967 = vmatprep.subr.bf16.mxu0 0
    %968 = vmatpush1.bf16.msra.mxu0 0
    %969 = vmatprep.subr.bf16.mxu0 0
    %970 = vmatpush1.bf16.msra.mxu0 0
    %971 = vmatprep.subr.bf16.mxu0 0
    %972 = vmatpush1.bf16.msra.mxu0 0
    %973 = vmatprep.subr.bf16.mxu0 0
    %974 = vmatpush1.bf16.msra.mxu0 0
    %975 = vmatprep.subr.bf16.mxu0 0
    %976 = vmatpush1.bf16.msra.mxu0 0
    %977 = vmatprep.subr.bf16.mxu0 0
    %978 = vmatpush1.bf16.msra.mxu0 0
    %979 = vmatprep.subr.bf16.mxu0 0
    %980 = vmatpush1.bf16.msra.mxu0 0
    %981 = vmatprep.subr.bf16.mxu0 0
    %982 = vmatpush1.bf16.msra.mxu0 0
    %983 = vmatprep.subr.bf16.mxu0 0
    %984 = vmatpush1.bf16.msra.mxu0 0
    %985 = vmatprep.subr.bf16.mxu0 0
    %986 = vmatpush1.bf16.msra.mxu0 0
    %987 = vmatprep.subr.bf16.mxu0 0
    %988 = vmatpush1.bf16.msra.mxu0 0
    %989 = vmatprep.subr.bf16.mxu0 0
    %990 = vmatpush1.bf16.msra.mxu0 0
    %991 = vmatprep.subr.bf16.mxu0 0
    %992 = vmatpush1.bf16.msra.mxu0 0
    %993 = vmatprep.subr.bf16.mxu0 0
    %994 = vmatpush1.bf16.msra.mxu0 0
    %995 = vmatprep.subr.bf16.mxu0 0
    %996 = vmatpush1.bf16.msra.mxu0 0
    %997 = vmatprep.mubr.bf16.mxu0 0
    %998 = vmatmul.mubr.bf16.gmra.mrb[0].mxu0 %v474
    %v999 = vpop.f32.mrb[0].mxu0
    %v1000 = vadd.f32 %v951, %v999
    %v1001 = vpop.f32.mrb[0].mxu0
    %v1002 = vpop.f32.mrb[0].mxu0
    %v1003 = vadd.f32 %v954, %v1002
    %v1004 = vpop.f32.mrb[0].mxu0
    %1005 = vmatprep.mubr.bf16.mxu0 0
    %1006 = vmatmul.mubr.bf16.gmra.mrb[0].mxu0 %v477
    %v1007 = vpop.f32.mrb[0].mxu0
    %v1008 = vadd.f32 %v959, %v1007
    %v1009 = vpop.f32.mrb[0].mxu0
    %v1010 = vpop.f32.mrb[0].mxu0
    %v1011 = vadd.f32 %v962, %v1010
    %v1012 = vpop.f32.mrb[0].mxu0
    %1013 = vdwg.mxu0
    %v1014 = vadd.f32 %v1000, %v851
    %v1015 = vadd.f32 %v1003, %v854
    %v1016 = vadd.f32 %v1008, %v859
    %v1017 = vadd.f32 %v1011, %v862
    %vm1018 = vcmp.ge.f32.partialorder %v1014, 0.0
    %vm1019 = vcmp.ge.f32.partialorder %v1015, 0.0
    %vm1020 = vcmp.ge.f32.partialorder %v1016, 0.0
    %vm1021 = vcmp.ge.f32.partialorder %v1017, 0.0
    %v1022 = vmul.f32 %v1014, 0.2
    %v1023 = vmul.f32 %v1015, 0.2
    %v1024 = vmul.f32 %v1016, 0.2
    %v1025 = vmul.f32 %v1017, 0.2
    %v1026 = vsel %vm1018, %v1014, %v1022
    %v1027 = vsel %vm1019, %v1015, %v1023
    %v1028 = vsel %vm1020, %v1016, %v1024
    %v1029 = vsel %vm1021, %v1017, %v1025
    %v1030 = vlaneseq
    %v1031 = vshrl.u32 %v1030, 7
    %v1032 = vsub.s32 2, %v1031
    %v1033 = vrot.slane %v722, %v1032
    %v1034 = vmul.f32 %v1026, %v1033
    %v1035 = vmul.f32 %v1027, %v1033
    %v1036 = vmul.f32 %v1028, %v1033
    %v1037 = vmul.f32 %v1029, %v1033
    %v1038 = vsel %vm138, %v1034, 0.0
    %1039 = vadd.xlane.f32.xlu0 %v1038
    %v1040 = vpop.xlane.xlu0 %1039
    %v1041 = vsel %vm138, %v1035, 0.0
    %1042 = vadd.xlane.f32.xlu0 %v1041
    %v1043 = vpop.xlane.xlu0 %1042
    %v1044 = vsel %vm138, %v1036, 0.0
    %1045 = vadd.xlane.f32.xlu0 %v1044
    %v1046 = vpop.xlane.xlu0 %1045
    %v1047 = vsel %vm138, %v1037, 0.0
    %1048 = vadd.xlane.f32.xlu0 %v1047
    %v1049 = vpop.xlane.xlu0 %1048
    %1052 = vrot.lane.b32.xlu0 %v798, 96
    %v1053 = vpop.permute.xlu0 %1052
    %1054 = vrot.lane.b32.xlu0 %v799, 96
    %v1055 = vpop.permute.xlu0 %1054
    %v1058 = vadd.f32 %v788, %v1053
    %v1059 = vadd.f32 %v789, %v1055
    %v1060 = vadd.f32 %v1058, %v908
    %v1061 = vadd.f32 %v1059, %v909
    %vm1062 = vcmp.ge.f32.partialorder %v1060, 0.0
    %vm1063 = vcmp.ge.f32.partialorder %v1061, 0.0
    %v1064 = vmul.f32 %v1060, 0.2
    %v1065 = vmul.f32 %v1061, 0.2
    %v1066 = vsel %vm1062, %v1060, %v1064
    %v1067 = vsel %vm1063, %v1061, %v1065
    %v1068 = vmul.f32 %v1066, %v1033
    %v1069 = vmul.f32 %v1067, %v1033
    %v1070 = vsel %vm138, %v1068, 0.0
    %1071 = vadd.xlane.f32.xlu0 %v1070
    %v1072 = vpop.xlane.xlu0 %1071
    %v1073 = vsel %vm138, %v1069, 0.0
    %1074 = vadd.xlane.f32.xlu0 %v1073
    %v1075 = vpop.xlane.xlu0 %1074
    %v1076 = vmul.f32 %v1040, %v97
    %v1077 = vmul.f32 %v1043, %v98
    %v1078 = vmul.f32 %v1046, %v99
    %v1079 = vmul.f32 %v1049, %v100
    %v1080 = vpack.c.bf16 %v1077, %v1076
    %v1081 = vpack.c.bf16 %v1079, %v1078
    %v1082 = vmul.f32 %v187, %v1072
    %v1083 = vmul.f32 %v188, %v1075
    %1084 = vmatprep.subr.bf16.mxu0 0
    %1085 = vmatpush1.bf16.msra.mxu0 %v1080
    %1086 = vmatprep.subr.bf16.mxu0 0
    %1087 = vmatpush1.bf16.msra.mxu0 %v1081
    %1088 = vmatprep.subr.bf16.mxu0 0
    %1089 = vmatpush1.bf16.msra.mxu0 0
    %1090 = vmatprep.subr.bf16.mxu0 0
    %1091 = vmatpush1.bf16.msra.mxu0 0
    %1092 = vmatprep.subr.bf16.mxu0 0
    %1093 = vmatpush1.bf16.msra.mxu0 0
    %1094 = vmatprep.subr.bf16.mxu0 0
    %1095 = vmatpush1.bf16.msra.mxu0 0
    %1096 = vmatprep.subr.bf16.mxu0 0
    %1097 = vmatpush1.bf16.msra.mxu0 0
    %1098 = vmatprep.subr.bf16.mxu0 0
    %1099 = vmatpush1.bf16.msra.mxu0 0
    %1100 = vmatprep.subr.bf16.mxu0 0
    %1101 = vmatpush1.bf16.msra.mxu0 0
    %1102 = vmatprep.subr.bf16.mxu0 0
    %1103 = vmatpush1.bf16.msra.mxu0 0
    %1104 = vmatprep.subr.bf16.mxu0 0
    %1105 = vmatpush1.bf16.msra.mxu0 0
    %1106 = vmatprep.subr.bf16.mxu0 0
    %1107 = vmatpush1.bf16.msra.mxu0 0
    %1108 = vmatprep.subr.bf16.mxu0 0
    %1109 = vmatpush1.bf16.msra.mxu0 0
    %1110 = vmatprep.subr.bf16.mxu0 0
    %1111 = vmatpush1.bf16.msra.mxu0 0
    %1112 = vmatprep.subr.bf16.mxu0 0
    %1113 = vmatpush1.bf16.msra.mxu0 0
    %1114 = vmatprep.subr.bf16.mxu0 0
    %1115 = vmatpush1.bf16.msra.mxu0 0
    %1116 = vmatprep.mubr.bf16.mxu0 0
    %1117 = vmatmul.mubr.bf16.gmra.mrb[0].mxu0 %v140
    %v1118 = vpop.f32.mrb[0].mxu0
    %v1119 = vadd.f32 %v1082, %v1118
    %v1120 = vpop.f32.mrb[0].mxu0
    %v1121 = vpop.f32.mrb[0].mxu0
    %v1122 = vadd.f32 %v1083, %v1121
    %v1123 = vpop.f32.mrb[0].mxu0
    %1124 = vdwg.mxu0
    %v1125 = vsel %vm191, %v1119, -1e+30
    %v1126 = vsel %vm192, %v1122, -1e+30
    %v1127 = vsel %vm193, %v1125, -inf
    %1128 = vmax.xlane.f32.xlu0 %v1127
    %v1129 = vpop.xlane.xlu0 %1128
    %v1130 = vsel %vm193, %v1126, -inf
    %1131 = vmax.xlane.f32.xlu0 %v1130
    %v1132 = vpop.xlane.xlu0 %1131
    %v1133 = vsub.f32 %v1125, %v1129
    %v1134 = vsub.f32 %v1126, %v1132
    %v1135 = vmul.f32 %v1133, 1.442695
    %v1136 = vpow.pop %v1135
    %v1137 = vmul.f32 %v1134, 1.442695
    %v1138 = vpow.pop %v1137
    %v1139 = vsel %vm193, %v1136, 0.0
    %1140 = vadd.xlane.f32.xlu0 %v1139
    %v1141 = vpop.xlane.xlu0 %1140
    %v1142 = vsel %vm193, %v1138, 0.0
    %1143 = vadd.xlane.f32.xlu0 %v1142
    %v1144 = vpop.xlane.xlu0 %1143
    %v1145 = vrcp.pop %v1141
    %v1146 = vmul.f32 %v1136, %v1145
    %v1147 = vrcp.pop %v1144
    %v1148 = vmul.f32 %v1138, %v1147
    %v1149 = vpack.c.bf16 %v1148, %v1146
    %v1151 = vsel %vm193, %v1149, 0
    %1153 = vmatprep.subr.bf16.mxu0 0
    %1154 = vmatpush1.bf16.msra.mxu0 %v910
    %1155 = vmatprep.subr.bf16.mxu0 0
    %1156 = vmatpush1.bf16.msra.mxu0 0
    %1157 = vmatprep.subr.bf16.mxu0 0
    %1158 = vmatpush1.bf16.msra.mxu0 0
    %1159 = vmatprep.subr.bf16.mxu0 0
    %1160 = vmatpush1.bf16.msra.mxu0 0
    %1161 = vmatprep.subr.bf16.mxu0 0
    %1162 = vmatpush1.bf16.msra.mxu0 0
    %1163 = vmatprep.subr.bf16.mxu0 0
    %1164 = vmatpush1.bf16.msra.mxu0 0
    %1165 = vmatprep.subr.bf16.mxu0 0
    %1166 = vmatpush1.bf16.msra.mxu0 0
    %1167 = vmatprep.subr.bf16.mxu0 0
    %1168 = vmatpush1.bf16.msra.mxu0 0
    %1169 = vmatprep.subr.bf16.mxu0 0
    %1170 = vmatpush1.bf16.msra.mxu0 0
    %1171 = vmatprep.subr.bf16.mxu0 0
    %1172 = vmatpush1.bf16.msra.mxu0 0
    %1173 = vmatprep.subr.bf16.mxu0 0
    %1174 = vmatpush1.bf16.msra.mxu0 0
    %1175 = vmatprep.subr.bf16.mxu0 0
    %1176 = vmatpush1.bf16.msra.mxu0 0
    %1177 = vmatprep.subr.bf16.mxu0 0
    %1178 = vmatpush1.bf16.msra.mxu0 0
    %1179 = vmatprep.subr.bf16.mxu0 0
    %1180 = vmatpush1.bf16.msra.mxu0 0
    %1181 = vmatprep.subr.bf16.mxu0 0
    %1182 = vmatpush1.bf16.msra.mxu0 0
    %1183 = vmatprep.subr.bf16.mxu0 0
    %1184 = vmatpush1.bf16.msra.mxu0 0
    %1185 = vmatprep.mubr.bf16.mxu0 0
    %1186 = vmatmul.mubr.bf16.gmra.mrb[0].mxu0 %v1151
    %v1187 = vpop.f32.mrb[0].mxu0
    %v1188 = vadd.f32 0.0, %v1187
    %v1189 = vpop.f32.mrb[0].mxu0
    %v1190 = vpop.f32.mrb[0].mxu0
    %v1191 = vadd.f32 0.0, %v1190
    %v1192 = vpop.f32.mrb[0].mxu0
    %1193 = vdwg.mxu0
    %v1194 = vlaneseq
    %v1195 = vshrl.u32 %v1194, 7
    %v1196 = vsub.s32 3, %v1195
    %v1197 = vrot.slane %v722, %v1196
    %v1198 = vmul.f32 %v1188, %v1197
    %v1199 = vmul.f32 %v1191, %v1197
    %v1200 = vlaneseq
    %v1201 = vshrl.u32 %v1200, 7
    %v1202 = vsub.s32 4, %v1201
    %v1203 = vrot.slane %v722, %v1202
    %v1204 = vadd.f32 %v1198, %v1203
    %v1205 = vadd.f32 %v1199, %v1203
    %v1206 = vtanh.pop %v1204
    %v1207 = vtanh.pop %v1205
    %v1208 = vld [vmem:[%s14] sm:$0xf]
    %v1209 = vld [vmem:[%s14 + $0x4] sm:$0xf]
    %v1210 = vld [vmem:[%s14 + $0x8] sm:$0xf]
    %v1211 = vld [vmem:[%s14 + $0xc] sm:$0xf]
    %v1212 = vld [vmem:[%s14 + $0x10] sm:$0xf]
    %v1213 = vld [vmem:[%s14 + $0x14] sm:$0xf]
    %v1214 = vld [vmem:[%s14 + $0x18] sm:$0xf]
    %v1215 = vld [vmem:[%s14 + $0x1c] sm:$0xf]
    %v1216 = vld [vmem:[%s14 + $0x20] sm:$0xf]
    %v1217 = vld [vmem:[%s14 + $0x24] sm:$0xf]
    %v1218 = vld [vmem:[%s14 + $0x28] sm:$0xf]
    %v1219 = vld [vmem:[%s14 + $0x2c] sm:$0xf]
    %v1220 = vld [vmem:[%s14 + $0x30] sm:$0xf]
    %v1221 = vld [vmem:[%s14 + $0x34] sm:$0xf]
    %v1222 = vld [vmem:[%s14 + $0x38] sm:$0xf]
    %v1223 = vld [vmem:[%s14 + $0x3c] sm:$0xf]
    %v1224 = vld [vmem:[%s14 + $0x40] sm:$0xf]
    %v1225 = vld [vmem:[%s14 + $0x44] sm:$0xf]
    %v1226 = vld [vmem:[%s14 + $0x48] sm:$0xf]
    %v1227 = vld [vmem:[%s14 + $0x4c] sm:$0xf]
    %v1228 = vld [vmem:[%s15] sm:$0xff]
    %v1229 = vpack.c.bf16 %v1207, %v1206
    %v1230 = vlaneseq
    %v1231 = vshrl.u32 %v1230, 7
    %v1232 = vsub.s32 0, %v1231
    %v1233 = vrot.slane %v1228, %v1232
    %v1238 = vunpack.c.l.b16 %v1208
    %v1239 = vunpack.c.l.b16 %v1209
    %v1240 = vunpack.c.l.b16 %v1210
    %v1241 = vunpack.c.l.b16 %v1211
    %v1242 = vpack.c.b16 %v1239, %v1238
    %v1243 = vpack.c.b16 %v1241, %v1240
    %v1247 = vsel %vm138, %v1229, 0
    %1249 = vmatprep.subr.bf16.mxu0 0
    %1250 = vmatpush1.bf16.msra.mxu0 %v1242
    %1251 = vmatprep.subr.bf16.mxu0 0
    %1252 = vmatpush1.bf16.msra.mxu0 %v1243
    %1253 = vmatprep.subr.bf16.mxu0 0
    %1254 = vmatpush1.bf16.msra.mxu0 0
    %1255 = vmatprep.subr.bf16.mxu0 0
    %1256 = vmatpush1.bf16.msra.mxu0 0
    %1257 = vmatprep.subr.bf16.mxu0 0
    %1258 = vmatpush1.bf16.msra.mxu0 0
    %1259 = vmatprep.subr.bf16.mxu0 0
    %1260 = vmatpush1.bf16.msra.mxu0 0
    %1261 = vmatprep.subr.bf16.mxu0 0
    %1262 = vmatpush1.bf16.msra.mxu0 0
    %1263 = vmatprep.subr.bf16.mxu0 0
    %1264 = vmatpush1.bf16.msra.mxu0 0
    %1265 = vmatprep.subr.bf16.mxu0 0
    %1266 = vmatpush1.bf16.msra.mxu0 0
    %1267 = vmatprep.subr.bf16.mxu0 0
    %1268 = vmatpush1.bf16.msra.mxu0 0
    %1269 = vmatprep.subr.bf16.mxu0 0
    %1270 = vmatpush1.bf16.msra.mxu0 0
    %1271 = vmatprep.subr.bf16.mxu0 0
    %1272 = vmatpush1.bf16.msra.mxu0 0
    %1273 = vmatprep.subr.bf16.mxu0 0
    %1274 = vmatpush1.bf16.msra.mxu0 0
    %1275 = vmatprep.subr.bf16.mxu0 0
    %1276 = vmatpush1.bf16.msra.mxu0 0
    %1277 = vmatprep.subr.bf16.mxu0 0
    %1278 = vmatpush1.bf16.msra.mxu0 0
    %1279 = vmatprep.subr.bf16.mxu0 0
    %1280 = vmatpush1.bf16.msra.mxu0 0
    %1281 = vmatprep.mubr.bf16.mxu0 0
    %1282 = vmatmul.mubr.bf16.gmra.mrb[0].mxu0 %v1247
    %v1283 = vpop.f32.mrb[0].mxu0
    %v1284 = vadd.f32 %v1233, %v1283
    %v1285 = vpop.f32.mrb[0].mxu0
    %v1286 = vpop.f32.mrb[0].mxu0
    %v1287 = vadd.f32 %v1233, %v1286
    %v1288 = vpop.f32.mrb[0].mxu0
    %1289 = vdwg.mxu0
    %v1290 = vtanh.pop %v1284
    %v1291 = vtanh.pop %v1287
    %v1292 = vpack.c.bf16 %v1291, %v1290
    %v1293 = vlaneseq
    %v1294 = vshrl.u32 %v1293, 7
    %v1295 = vsub.s32 1, %v1294
    %v1296 = vrot.slane %v1228, %v1295
    %v1301 = vunpack.c.l.b16 %v1212
    %v1302 = vunpack.c.l.b16 %v1213
    %v1303 = vunpack.c.l.b16 %v1214
    %v1304 = vunpack.c.l.b16 %v1215
    %v1305 = vpack.c.b16 %v1302, %v1301
    %v1306 = vpack.c.b16 %v1304, %v1303
    %v1310 = vsel %vm138, %v1292, 0
    %1312 = vmatprep.subr.bf16.mxu0 0
    %1313 = vmatpush1.bf16.msra.mxu0 %v1305
    %1314 = vmatprep.subr.bf16.mxu0 0
    %1315 = vmatpush1.bf16.msra.mxu0 %v1306
    %1316 = vmatprep.subr.bf16.mxu0 0
    %1317 = vmatpush1.bf16.msra.mxu0 0
    %1318 = vmatprep.subr.bf16.mxu0 0
    %1319 = vmatpush1.bf16.msra.mxu0 0
    %1320 = vmatprep.subr.bf16.mxu0 0
    %1321 = vmatpush1.bf16.msra.mxu0 0
    %1322 = vmatprep.subr.bf16.mxu0 0
    %1323 = vmatpush1.bf16.msra.mxu0 0
    %1324 = vmatprep.subr.bf16.mxu0 0
    %1325 = vmatpush1.bf16.msra.mxu0 0
    %1326 = vmatprep.subr.bf16.mxu0 0
    %1327 = vmatpush1.bf16.msra.mxu0 0
    %1328 = vmatprep.subr.bf16.mxu0 0
    %1329 = vmatpush1.bf16.msra.mxu0 0
    %1330 = vmatprep.subr.bf16.mxu0 0
    %1331 = vmatpush1.bf16.msra.mxu0 0
    %1332 = vmatprep.subr.bf16.mxu0 0
    %1333 = vmatpush1.bf16.msra.mxu0 0
    %1334 = vmatprep.subr.bf16.mxu0 0
    %1335 = vmatpush1.bf16.msra.mxu0 0
    %1336 = vmatprep.subr.bf16.mxu0 0
    %1337 = vmatpush1.bf16.msra.mxu0 0
    %1338 = vmatprep.subr.bf16.mxu0 0
    %1339 = vmatpush1.bf16.msra.mxu0 0
    %1340 = vmatprep.subr.bf16.mxu0 0
    %1341 = vmatpush1.bf16.msra.mxu0 0
    %1342 = vmatprep.subr.bf16.mxu0 0
    %1343 = vmatpush1.bf16.msra.mxu0 0
    %1344 = vmatprep.mubr.bf16.mxu0 0
    %1345 = vmatmul.mubr.bf16.gmra.mrb[0].mxu0 %v1310
    %v1346 = vpop.f32.mrb[0].mxu0
    %v1347 = vadd.f32 %v1296, %v1346
    %v1348 = vpop.f32.mrb[0].mxu0
    %v1349 = vpop.f32.mrb[0].mxu0
    %v1350 = vadd.f32 %v1296, %v1349
    %v1351 = vpop.f32.mrb[0].mxu0
    %1352 = vdwg.mxu0
    %v1353 = vsel %vm138, %v1347, -inf
    %v1354 = vsel %vm138, %v1350, -inf
    %v1355 = vmax.f32 %v1353, %v1354
    %v1356 = vrot.slane %v1355, 4
    %v1357 = vmax.f32 %v1355, %v1356
    %v1358 = vrot.slane %v1357, 2
    %v1359 = vmax.f32 %v1357, %v1358
    %v1360 = vrot.slane %v1359, 1
    %v1361 = vmax.f32 %v1359, %v1360
    %v1362 = vsub.f32 %v1347, %v1361
    %v1363 = vsub.f32 %v1350, %v1361
    %v1364 = vmul.f32 %v1362, 1.442695
    %v1365 = vpow.pop %v1364
    %v1366 = vmul.f32 %v1363, 1.442695
    %v1367 = vpow.pop %v1366
    %v1368 = vmul.f32 %v1365, %v1206
    %v1369 = vmul.f32 %v1367, %v1207
    %v1370 = vsel %vm130, 1, 0
    %v1371 = vcvt.s32.f32 %v1370
    %v1372 = vpack.c.bf16 %v1371, %v1371
    %v1373 = vpack.c.bf16 %v1369, %v1368
    %v1375 = vsel %vm193, %v1372, 0
    %1377 = vmatprep.subr.bf16.mxu0 0
    %1378 = vmatpush1.bf16.msra.mxu0 %v1373
    %1379 = vmatprep.subr.bf16.mxu0 0
    %1380 = vmatpush1.bf16.msra.mxu0 0
    %1381 = vmatprep.subr.bf16.mxu0 0
    %1382 = vmatpush1.bf16.msra.mxu0 0
    %1383 = vmatprep.subr.bf16.mxu0 0
    %1384 = vmatpush1.bf16.msra.mxu0 0
    %1385 = vmatprep.subr.bf16.mxu0 0
    %1386 = vmatpush1.bf16.msra.mxu0 0
    %1387 = vmatprep.subr.bf16.mxu0 0
    %1388 = vmatpush1.bf16.msra.mxu0 0
    %1389 = vmatprep.subr.bf16.mxu0 0
    %1390 = vmatpush1.bf16.msra.mxu0 0
    %1391 = vmatprep.subr.bf16.mxu0 0
    %1392 = vmatpush1.bf16.msra.mxu0 0
    %1393 = vmatprep.subr.bf16.mxu0 0
    %1394 = vmatpush1.bf16.msra.mxu0 0
    %1395 = vmatprep.subr.bf16.mxu0 0
    %1396 = vmatpush1.bf16.msra.mxu0 0
    %1397 = vmatprep.subr.bf16.mxu0 0
    %1398 = vmatpush1.bf16.msra.mxu0 0
    %1399 = vmatprep.subr.bf16.mxu0 0
    %1400 = vmatpush1.bf16.msra.mxu0 0
    %1401 = vmatprep.subr.bf16.mxu0 0
    %1402 = vmatpush1.bf16.msra.mxu0 0
    %1403 = vmatprep.subr.bf16.mxu0 0
    %1404 = vmatpush1.bf16.msra.mxu0 0
    %1405 = vmatprep.subr.bf16.mxu0 0
    %1406 = vmatpush1.bf16.msra.mxu0 0
    %1407 = vmatprep.subr.bf16.mxu0 0
    %1408 = vmatpush1.bf16.msra.mxu0 0
    %1409 = vmatprep.mubr.bf16.mxu0 0
    %1410 = vmatmul.mubr.bf16.gmra.mrb[0].mxu0 %v1375
    %v1411 = vpop.f32.mrb[0].mxu0
    %v1412 = vadd.f32 0.0, %v1411
    %v1413 = vpop.f32.mrb[0].mxu0
    %v1414 = vpop.f32.mrb[0].mxu0
    %v1415 = vpop.f32.mrb[0].mxu0
    %1416 = vdwg.mxu0
    %v1417 = vpack.c.bf16 %v1367, %v1365
    %1418 = vmatprep.subr.bf16.mxu0 0
    %1419 = vmatpush1.bf16.msra.mxu0 %v1417
    %1420 = vmatprep.subr.bf16.mxu0 0
    %1421 = vmatpush1.bf16.msra.mxu0 0
    %1422 = vmatprep.subr.bf16.mxu0 0
    %1423 = vmatpush1.bf16.msra.mxu0 0
    %1424 = vmatprep.subr.bf16.mxu0 0
    %1425 = vmatpush1.bf16.msra.mxu0 0
    %1426 = vmatprep.subr.bf16.mxu0 0
    %1427 = vmatpush1.bf16.msra.mxu0 0
    %1428 = vmatprep.subr.bf16.mxu0 0
    %1429 = vmatpush1.bf16.msra.mxu0 0
    %1430 = vmatprep.subr.bf16.mxu0 0
    %1431 = vmatpush1.bf16.msra.mxu0 0
    %1432 = vmatprep.subr.bf16.mxu0 0
    %1433 = vmatpush1.bf16.msra.mxu0 0
    %1434 = vmatprep.subr.bf16.mxu0 0
    %1435 = vmatpush1.bf16.msra.mxu0 0
    %1436 = vmatprep.subr.bf16.mxu0 0
    %1437 = vmatpush1.bf16.msra.mxu0 0
    %1438 = vmatprep.subr.bf16.mxu0 0
    %1439 = vmatpush1.bf16.msra.mxu0 0
    %1440 = vmatprep.subr.bf16.mxu0 0
    %1441 = vmatpush1.bf16.msra.mxu0 0
    %1442 = vmatprep.subr.bf16.mxu0 0
    %1443 = vmatpush1.bf16.msra.mxu0 0
    %1444 = vmatprep.subr.bf16.mxu0 0
    %1445 = vmatpush1.bf16.msra.mxu0 0
    %1446 = vmatprep.subr.bf16.mxu0 0
    %1447 = vmatpush1.bf16.msra.mxu0 0
    %1448 = vmatprep.subr.bf16.mxu0 0
    %1449 = vmatpush1.bf16.msra.mxu0 0
    %1450 = vmatprep.mubr.bf16.mxu0 0
    %1451 = vmatmul.mubr.bf16.gmra.mrb[0].mxu0 %v1375
    %v1452 = vpop.f32.mrb[0].mxu0
    %v1453 = vadd.f32 0.0, %v1452
    %v1454 = vpop.f32.mrb[0].mxu0
    %v1455 = vpop.f32.mrb[0].mxu0
    %v1456 = vpop.f32.mrb[0].mxu0
    %1457 = vdwg.mxu0
    %v1458 = vmax.f32 %v1453, 1e-12
    %v1459 = vrcp.pop %v1458
    %v1460 = vmul.f32 %v1412, %v1459
    %v1461 = vpack.c.bf16 %v1460, %v1460
    %v1462 = vlaneseq
    %v1463 = vshrl.u32 %v1462, 7
    %v1464 = vsub.s32 2, %v1463
    %v1465 = vrot.slane %v1228, %v1464
    %v1470 = vunpack.c.l.b16 %v1216
    %v1471 = vunpack.c.l.b16 %v1217
    %v1472 = vunpack.c.l.b16 %v1218
    %v1473 = vunpack.c.l.b16 %v1219
    %v1474 = vpack.c.b16 %v1471, %v1470
    %v1475 = vpack.c.b16 %v1473, %v1472
    %v1479 = vsel %vm138, %v1461, 0
    %1481 = vmatprep.subr.bf16.mxu0 0
    %1482 = vmatpush1.bf16.msra.mxu0 %v1474
    %1483 = vmatprep.subr.bf16.mxu0 0
    %1484 = vmatpush1.bf16.msra.mxu0 %v1475
    %1485 = vmatprep.subr.bf16.mxu0 0
    %1486 = vmatpush1.bf16.msra.mxu0 0
    %1487 = vmatprep.subr.bf16.mxu0 0
    %1488 = vmatpush1.bf16.msra.mxu0 0
    %1489 = vmatprep.subr.bf16.mxu0 0
    %1490 = vmatpush1.bf16.msra.mxu0 0
    %1491 = vmatprep.subr.bf16.mxu0 0
    %1492 = vmatpush1.bf16.msra.mxu0 0
    %1493 = vmatprep.subr.bf16.mxu0 0
    %1494 = vmatpush1.bf16.msra.mxu0 0
    %1495 = vmatprep.subr.bf16.mxu0 0
    %1496 = vmatpush1.bf16.msra.mxu0 0
    %1497 = vmatprep.subr.bf16.mxu0 0
    %1498 = vmatpush1.bf16.msra.mxu0 0
    %1499 = vmatprep.subr.bf16.mxu0 0
    %1500 = vmatpush1.bf16.msra.mxu0 0
    %1501 = vmatprep.subr.bf16.mxu0 0
    %1502 = vmatpush1.bf16.msra.mxu0 0
    %1503 = vmatprep.subr.bf16.mxu0 0
    %1504 = vmatpush1.bf16.msra.mxu0 0
    %1505 = vmatprep.subr.bf16.mxu0 0
    %1506 = vmatpush1.bf16.msra.mxu0 0
    %1507 = vmatprep.subr.bf16.mxu0 0
    %1508 = vmatpush1.bf16.msra.mxu0 0
    %1509 = vmatprep.subr.bf16.mxu0 0
    %1510 = vmatpush1.bf16.msra.mxu0 0
    %1511 = vmatprep.subr.bf16.mxu0 0
    %1512 = vmatpush1.bf16.msra.mxu0 0
    %1513 = vmatprep.mubr.bf16.mxu0 0
    %1514 = vmatmul.mubr.bf16.gmra.mrb[0].mxu0 %v1479
    %v1515 = vpop.f32.mrb[0].mxu0
    %v1516 = vadd.f32 %v1465, %v1515
    %v1517 = vpop.f32.mrb[0].mxu0
    %v1518 = vpop.f32.mrb[0].mxu0
    %v1519 = vpop.f32.mrb[0].mxu0
    %1520 = vdwg.mxu0
    %v1521 = vmul.f32 %v1516, %v1516
    %vm1522 = vcmask 254976
    %v1523 = vsel %vm1522, %v1521, 0.0
    %1524 = vadd.xlane.f32.xlu0 %v1523
    %v1525 = vpop.xlane.xlu0 %1524
    %v1526 = vmax.f32 %v1525, 1e-24
    %v1527 = vrsqrt.pop %v1526
    %v1528 = vmul.f32 %v1516, %v1527
    %1529 = vst.msk [vmem:[#allocation2] sm:$0x3] %vm1522, %v1528
    %v1530 = vld [vmem:[%s6] sm:$0x3]
    %v1531 = vpack.c.bf16 %v1530, %v1530
    %v1536 = vunpack.c.l.b16 %v1220
    %v1537 = vunpack.c.l.b16 %v1221
    %v1538 = vunpack.c.l.b16 %v1222
    %v1539 = vunpack.c.l.b16 %v1223
    %v1540 = vpack.c.b16 %v1537, %v1536
    %v1541 = vpack.c.b16 %v1539, %v1538
    %v1545 = vsel %vm138, %v1531, 0
    %1547 = vmatprep.subr.bf16.mxu0 0
    %1548 = vmatpush1.bf16.msra.mxu0 %v1540
    %1549 = vmatprep.subr.bf16.mxu0 0
    %1550 = vmatpush1.bf16.msra.mxu0 %v1541
    %1551 = vmatprep.subr.bf16.mxu0 0
    %1552 = vmatpush1.bf16.msra.mxu0 0
    %1553 = vmatprep.subr.bf16.mxu0 0
    %1554 = vmatpush1.bf16.msra.mxu0 0
    %1555 = vmatprep.subr.bf16.mxu0 0
    %1556 = vmatpush1.bf16.msra.mxu0 0
    %1557 = vmatprep.subr.bf16.mxu0 0
    %1558 = vmatpush1.bf16.msra.mxu0 0
    %1559 = vmatprep.subr.bf16.mxu0 0
    %1560 = vmatpush1.bf16.msra.mxu0 0
    %1561 = vmatprep.subr.bf16.mxu0 0
    %1562 = vmatpush1.bf16.msra.mxu0 0
    %1563 = vmatprep.subr.bf16.mxu0 0
    %1564 = vmatpush1.bf16.msra.mxu0 0
    %1565 = vmatprep.subr.bf16.mxu0 0
    %1566 = vmatpush1.bf16.msra.mxu0 0
    %1567 = vmatprep.subr.bf16.mxu0 0
    %1568 = vmatpush1.bf16.msra.mxu0 0
    %1569 = vmatprep.subr.bf16.mxu0 0
    %1570 = vmatpush1.bf16.msra.mxu0 0
    %1571 = vmatprep.subr.bf16.mxu0 0
    %1572 = vmatpush1.bf16.msra.mxu0 0
    %1573 = vmatprep.subr.bf16.mxu0 0
    %1574 = vmatpush1.bf16.msra.mxu0 0
    %1575 = vmatprep.subr.bf16.mxu0 0
    %1576 = vmatpush1.bf16.msra.mxu0 0
    %1577 = vmatprep.subr.bf16.mxu0 0
    %1578 = vmatpush1.bf16.msra.mxu0 0
    %1579 = vmatprep.mubr.bf16.mxu0 0
    %1580 = vmatmul.mubr.bf16.gmra.mrb[0].mxu0 %v1545
    %v1581 = vpop.f32.mrb[0].mxu0
    %v1582 = vadd.f32 0.0, %v1581
    %v1583 = vpop.f32.mrb[0].mxu0
    %v1584 = vpop.f32.mrb[0].mxu0
    %v1585 = vpop.f32.mrb[0].mxu0
    %1586 = vdwg.mxu0
    %v1587 = vlaneseq
    %v1588 = vshrl.u32 %v1587, 7
    %v1589 = vsub.s32 3, %v1588
    %v1590 = vrot.slane %v1228, %v1589
    %v1591 = vmul.f32 %v1582, %v1590
    %v1592 = vlaneseq
    %v1593 = vshrl.u32 %v1592, 7
    %v1594 = vsub.s32 4, %v1593
    %v1595 = vrot.slane %v1228, %v1594
    %v1596 = vadd.f32 %v1591, %v1595
    %v1597 = vtanh.pop %v1596
    %v1598 = vmul.f32 %v1597, %v1597
    %v1599 = vsel %vm1522, %v1598, 0.0
    %1600 = vadd.xlane.f32.xlu0 %v1599
    %v1601 = vpop.xlane.xlu0 %1600
    %v1602 = vmax.f32 %v1601, 1e-24
    %v1603 = vrsqrt.pop %v1602
    %v1604 = vmul.f32 %v1597, %v1603
    %1605 = vst.msk [vmem:[#allocation4] sm:$0x3] %vm1522, %v1604
    %v1606 = vld [vmem:[%s7] sm:$0x3]
    %v1607 = vpack.c.bf16 %v1606, %v1606
    %v1612 = vunpack.c.l.b16 %v1224
    %v1613 = vunpack.c.l.b16 %v1225
    %v1614 = vunpack.c.l.b16 %v1226
    %v1615 = vunpack.c.l.b16 %v1227
    %v1616 = vpack.c.b16 %v1613, %v1612
    %v1617 = vpack.c.b16 %v1615, %v1614
    %v1621 = vsel %vm138, %v1607, 0
    %1623 = vmatprep.subr.bf16.mxu0 0
    %1624 = vmatpush1.bf16.msra.mxu0 %v1616
    %1625 = vmatprep.subr.bf16.mxu0 0
    %1626 = vmatpush1.bf16.msra.mxu0 %v1617
    %1627 = vmatprep.subr.bf16.mxu0 0
    %1628 = vmatpush1.bf16.msra.mxu0 0
    %1629 = vmatprep.subr.bf16.mxu0 0
    %1630 = vmatpush1.bf16.msra.mxu0 0
    %1631 = vmatprep.subr.bf16.mxu0 0
    %1632 = vmatpush1.bf16.msra.mxu0 0
    %1633 = vmatprep.subr.bf16.mxu0 0
    %1634 = vmatpush1.bf16.msra.mxu0 0
    %1635 = vmatprep.subr.bf16.mxu0 0
    %1636 = vmatpush1.bf16.msra.mxu0 0
    %1637 = vmatprep.subr.bf16.mxu0 0
    %1638 = vmatpush1.bf16.msra.mxu0 0
    %1639 = vmatprep.subr.bf16.mxu0 0
    %1640 = vmatpush1.bf16.msra.mxu0 0
    %1641 = vmatprep.subr.bf16.mxu0 0
    %1642 = vmatpush1.bf16.msra.mxu0 0
    %1643 = vmatprep.subr.bf16.mxu0 0
    %1644 = vmatpush1.bf16.msra.mxu0 0
    %1645 = vmatprep.subr.bf16.mxu0 0
    %1646 = vmatpush1.bf16.msra.mxu0 0
    %1647 = vmatprep.subr.bf16.mxu0 0
    %1648 = vmatpush1.bf16.msra.mxu0 0
    %1649 = vmatprep.subr.bf16.mxu0 0
    %1650 = vmatpush1.bf16.msra.mxu0 0
    %1651 = vmatprep.subr.bf16.mxu0 0
    %1652 = vmatpush1.bf16.msra.mxu0 0
    %1653 = vmatprep.subr.bf16.mxu0 0
    %1654 = vmatpush1.bf16.msra.mxu0 0
    %1655 = vmatprep.mubr.bf16.mxu0 0
    %1656 = vmatmul.mubr.bf16.gmra.mrb[0].mxu0 %v1621
    %v1657 = vpop.f32.mrb[0].mxu0
    %v1658 = vadd.f32 0.0, %v1657
    %v1659 = vpop.f32.mrb[0].mxu0
    %v1660 = vpop.f32.mrb[0].mxu0
    %v1661 = vpop.f32.mrb[0].mxu0
    %1662 = vdwg.mxu0
    %v1663 = vlaneseq
    %v1664 = vshrl.u32 %v1663, 7
    %v1665 = vsub.s32 5, %v1664
    %v1666 = vrot.slane %v1228, %v1665
    %v1667 = vmul.f32 %v1658, %v1666
    %v1668 = vlaneseq
    %v1669 = vshrl.u32 %v1668, 7
    %v1670 = vsub.s32 6, %v1669
    %v1671 = vrot.slane %v1228, %v1670
    %v1672 = vadd.f32 %v1667, %v1671
    %v1673 = vtanh.pop %v1672
    %v1674 = vmul.f32 %v1673, %v1673
    %v1675 = vsel %vm1522, %v1674, 0.0
    %1676 = vadd.xlane.f32.xlu0 %v1675
    %v1677 = vpop.xlane.xlu0 %1676
    %v1678 = vmax.f32 %v1677, 1e-24
    %v1679 = vrsqrt.pop %v1678
    %v1680 = vmul.f32 %v1673, %v1679
    %1681 = vst.msk [vmem:[#allocation6] sm:$0x3] %vm1522, %v1680
    // Predicated region
    $region66: #{encoder_forward.1} parent=1 // pred_check
      _
    $region67: #{encoder_forward.1} parent=1 // pred_check_branch
      %1683 = sbr.rel (0) target = $region69
    $region68: #{encoder_forward.1} parent=1 // pred_region
      %s1685 = ssub.s32 32, 32
      %1686 = vsyncadd [#allocation3], %s1685
      %s1688 = sshll.u32 [#allocation2], 4
      %s1689 = int_to_ptr.vmem [resolvable:$true] %s1688
      %1691 = dma.vmem_to_hbm [thread:$0]  %s1689, 32, %s16, [#allocation3]
    $region69: #{encoder_forward.1} parent=1 // pred_fallthru
      _
    // Predicated region
    $region70: #{encoder_forward.1} parent=1 // pred_check
      _
    $region71: #{encoder_forward.1} parent=1 // pred_check_branch
      %1693 = sbr.rel (0) target = $region73
    $region72: #{encoder_forward.1} parent=1 // pred_region
      %s1695 = ssub.s32 32, 32
      %1696 = vsyncadd [#allocation5], %s1695
      %s1698 = sshll.u32 [#allocation4], 4
      %s1699 = int_to_ptr.vmem [resolvable:$true] %s1698
      %1701 = dma.vmem_to_hbm [thread:$0]  %s1699, 32, %s17, [#allocation5]
    $region73: #{encoder_forward.1} parent=1 // pred_fallthru
      _
    // Predicated region
    $region74: #{encoder_forward.1} parent=1 // pred_check
      _
    $region75: #{encoder_forward.1} parent=1 // pred_check_branch
      %1703 = sbr.rel (0) target = $region77
    $region76: #{encoder_forward.1} parent=1 // pred_region
      %s1705 = ssub.s32 32, 32
      %1706 = vsyncadd [#allocation5], %s1705
      %s1708 = sshll.u32 [#allocation6], 4
      %s1709 = int_to_ptr.vmem [resolvable:$true] %s1708
      %1711 = dma.vmem_to_hbm [thread:$0]  %s1709, 32, %s18, [#allocation5]
    $region77: #{encoder_forward.1} parent=1 // pred_fallthru
      _
    // Predicated region
    $region78: #{encoder_forward.1} parent=1 // pred_check
      _
    $region79: #{encoder_forward.1} parent=1 // pred_check_branch
      %1713 = sbr.rel (0) target = $region81
    $region80: #{encoder_forward.1} parent=1 // pred_region
      %1714 = dma.done [#allocation3], 32
    $region81: #{encoder_forward.1} parent=1 // pred_fallthru
      _
    // Predicated region
    $region82: #{encoder_forward.1} parent=1 // pred_check
      _
    $region83: #{encoder_forward.1} parent=1 // pred_check_branch
      %1716 = sbr.rel (0) target = $region85
    $region84: #{encoder_forward.1} parent=1 // pred_region
      %1717 = dma.done [#allocation5], 32
    $region85: #{encoder_forward.1} parent=1 // pred_fallthru
      _
    // Predicated region
    $region86: #{encoder_forward.1} parent=1 // pred_check
      _
    $region87: #{encoder_forward.1} parent=1 // pred_check_branch
      %1719 = sbr.rel (0) target = $region89
    $region88: #{encoder_forward.1} parent=1 // pred_region
      %1720 = dma.done [#allocation5], 32
    $region89: #{encoder_forward.1} parent=1 // pred_fallthru
      _
    %1721 = vsyncpa [#allocation3], 1
    %1722 = vsyncpa [#allocation5], 1

</llo_original>
